<compile_context>
chip_gen: v7x
topology: tpu7x:2x2x1
jax: 0.10.0
libtpu: 0.0.40
codegen_flags: <defaults>
</compile_context>

<pallas_src>
import jax
import jax.numpy as jnp
from jax.experimental import pallas as pl
from jax.experimental.pallas import tpu as pltpu

_BN_EPS = 1e-5
_LANE = 128


def _round_up(n, m=_LANE):
    return ((n + m - 1) // m) * m


def _pad_last(a, target, value=0.0):
    pad = target - a.shape[-1]
    if pad == 0:
        return a
    return jnp.pad(a, [(0, 0)] * (a.ndim - 1) + [(0, pad)], constant_values=value)


def _pad_2d(w, rows, cols):
    return jnp.pad(w, ((0, rows - w.shape[0]), (0, cols - w.shape[1])))


def _vec_layout(Dp, Hp, Op):
    """Packed (1, total) vector-parameter layout; every segment is 128-aligned."""
    order = [
        ("b_p1", Hp), ("g_pbn1", Hp), ("be_pbn1", Hp),
        ("b_p2", Hp), ("g_pbn2", Hp), ("be_pbn2", Hp),
        ("b_p3", Dp),
        ("b_f1", Hp), ("g_bn1", Hp), ("be_bn1", Hp),
        ("b_f2", Hp), ("g_bn2", Hp), ("be_bn2", Hp),
        ("b_f4", Op),
    ]
    offsets, cur = {}, 0
    for name, size in order:
        offsets[name] = (cur, size)
        cur += size
    return order, offsets, cur


def _prepare_packed_params(params, D, H, O):
    """Pad weights to 128-multiples and pack all (1,N) vectors into one array."""
    Dp, Hp, Op = _round_up(D), _round_up(H), _round_up(O)
    order, _, total = _vec_layout(Dp, Hp, Op)

    weights = [
        _pad_2d(params["w_p1"], Dp, Hp),   # phi_fc1
        _pad_2d(params["w_p2"], Hp, Hp),   # phi_fc2
        _pad_2d(params["w_p3"], Hp, Dp),   # phi_fc3
        _pad_2d(params["w_f1"], Dp, Hp),   # fc1
        _pad_2d(params["w_f2"], Hp, Hp),   # fc2
        _pad_2d(params["w_f4"], Hp, Op),   # fc4
    ]

    segs = []
    for name, size in order:
        a = params[name].reshape(1, -1)
        pad_val = 1.0 if name.startswith("g_") else 0.0   # gamma pads with 1, rest 0
        segs.append(_pad_last(a, size, pad_val))
    vec = jnp.concatenate(segs, axis=1)
    assert vec.shape == (1, total)
    return weights, vec


def _make_kernel(D, Dp, Hp, Op, offsets):
    def kernel(x_ref, w_p1_ref, w_p2_ref, w_p3_ref,
               w_f1_ref, w_f2_ref, w_f4_ref, vec_ref, out_ref):
        def vec(name):
            off, size = offsets[name]
            return vec_ref[:, off:off + size]          # static, 128-aligned slice

        def bn(h, gamma, beta):
            # PyTorch BatchNorm1d training mode: batch mean, biased batch variance.
            mu = jnp.mean(h, axis=0, keepdims=True)
            var = jnp.mean((h - mu) ** 2, axis=0, keepdims=True)
            return (h - mu) * jax.lax.rsqrt(var + _BN_EPS) * gamma + beta

        def softplus(t):
            # PyTorch F.softplus, beta=1, threshold=20.
            return jnp.where(t > 20.0, t, jnp.log1p(jnp.exp(jnp.minimum(t, 20.0))))

        x = x_ref[...]

        # ---- phi (importance / switch) network ----
        h = jnp.dot(x, w_p1_ref[...], preferred_element_type=jnp.float32) + vec("b_p1")
        h = bn(h, vec("g_pbn1"), vec("be_pbn1"))
        h = jnp.maximum(
            jnp.dot(h, w_p2_ref[...], preferred_element_type=jnp.float32) + vec("b_p2"),
            0.0)
        h = bn(h, vec("g_pbn2"), vec("be_pbn2"))
        pre_phi = jnp.dot(h, w_p3_ref[...], preferred_element_type=jnp.float32) + vec("b_p3")
        phi = softplus(pre_phi)

        # Zero the padded feature columns (softplus(0)=log 2 there) so the row-sum
        # only covers the D real features.
        lane = jax.lax.broadcasted_iota(jnp.int32, (1, Dp), 1)
        phi = jnp.where(lane < D, phi, 0.0)

        # ---- point-estimate switch: S = phi / sum_j phi_j ----
        row_sum = jnp.sum(phi, axis=1, keepdims=True)
        s = phi * pl.reciprocal(row_sum, approx=True)

        # ---- main classifier on the gated input ----
        g = x * s
        h = jnp.dot(g, w_f1_ref[...], preferred_element_type=jnp.float32) + vec("b_f1")
        h = bn(h, vec("g_bn1"), vec("be_bn1"))
        h = jnp.maximum(
            jnp.dot(h, w_f2_ref[...], preferred_element_type=jnp.float32) + vec("b_f2"),
            0.0)
        h = bn(h, vec("g_bn2"), vec("be_bn2"))
        out = jnp.dot(h, w_f4_ref[...], preferred_element_type=jnp.float32) + vec("b_f4")

        # ---- single lane-dense output slab: [out | phi | S | pre_phi] ----
        out_ref[:, 0:Op] = out
        out_ref[:, Op:Op + Dp] = phi
        out_ref[:, Op + Dp:Op + 2 * Dp] = s
        out_ref[:, Op + 2 * Dp:Op + 3 * Dp] = pre_phi

    return kernel


def switch_mlp_forward(x, params):
    """Returns (output, phi, S, pre_phi, None) like the PyTorch module."""
    B, D = x.shape
    H = params["w_p2"].shape[0]
    O = params["w_f4"].shape[1]
    Dp, Hp, Op = _round_up(D), _round_up(H), _round_up(O)
    _, offsets, _ = _vec_layout(Dp, Hp, Op)

    x_p = _pad_last(x, Dp)
    weights, vec = _prepare_packed_params(params, D, H, O)
    kernel = _make_kernel(D, Dp, Hp, Op, offsets)

    slab_w = Op + 3 * Dp
    flops = 2 * B * (Dp * Hp + Hp * Hp + Hp * Dp + Dp * Hp + Hp * Hp + Hp * Op)
    bytes_accessed = 4 * (x_p.size + sum(int(w.size) for w in weights)
                          + int(vec.size) + B * slab_w)
    transcendentals = 3 * B * Dp

    vmem = pl.BlockSpec(memory_space=pltpu.MemorySpace.VMEM)
    slab = pl.pallas_call(
        kernel,
        out_shape=jax.ShapeDtypeStruct((B, slab_w), jnp.float32),
        in_specs=[vmem] * (2 + len(weights)),
        out_specs=vmem,
        cost_estimate=pl.CostEstimate(
            flops=flops,
            transcendentals=transcendentals,
            bytes_accessed=bytes_accessed),
    )(x_p, *weights, vec)

    output = slab[:, :O]
    phi = slab[:, Op:Op + D]
    S = slab[:, Op + Dp:Op + Dp + D]
    pre_phi = slab[:, Op + 2 * Dp:Op + 2 * Dp + D]
    return output, phi, S, pre_phi, None


def init_params(key, input_num, output_num, hidden=200):
    """Deterministic PyTorch-style init.  Linear weights stored as (in, out)."""
    def linear(k, fan_in, fan_out):
        k1, k2 = jax.random.split(k)
        bound = float(fan_in) ** -0.5
        w = jax.random.uniform(k1, (fan_in, fan_out), jnp.float32, -bound, bound)
        b = jax.random.uniform(k2, (1, fan_out), jnp.float32, -bound, bound)
        return w, b

    def bn(n):
        return jnp.ones((1, n), jnp.float32), jnp.zeros((1, n), jnp.float32)

    ks = jax.random.split(key, 6)
    p = {}
    p["w_p1"], p["b_p1"] = linear(ks[0], input_num, hidden)   # phi_fc1
    p["g_pbn1"], p["be_pbn1"] = bn(hidden)                    # fc1_bn1
    p["w_p2"], p["b_p2"] = linear(ks[1], hidden, hidden)      # phi_fc2
    p["g_pbn2"], p["be_pbn2"] = bn(hidden)                    # fc2_bn2
    p["w_p3"], p["b_p3"] = linear(ks[2], hidden, input_num)   # phi_fc3
    p["w_f1"], p["b_f1"] = linear(ks[3], input_num, hidden)   # fc1
    p["g_bn1"], p["be_bn1"] = bn(hidden)                      # bn1
    p["w_f2"], p["b_f2"] = linear(ks[4], hidden, hidden)      # fc2
    p["g_bn2"], p["be_bn2"] = bn(hidden)                      # bn2
    p["w_f4"], p["b_f4"] = linear(ks[5], hidden, output_num)  # fc4
    return p


def reference_forward(x, params):
    """Plain-JAX reference mirroring the PyTorch forward (point_estimate=True)."""
    def bn(h, g, b):
        mu = jnp.mean(h, axis=0, keepdims=True)
        var = jnp.mean((h - mu) ** 2, axis=0, keepdims=True)
        return (h - mu) / jnp.sqrt(var + _BN_EPS) * g + b

    def softplus(t):
        return jnp.where(t > 20.0, t, jnp.log1p(jnp.exp(jnp.minimum(t, 20.0))))

    h = x @ params["w_p1"] + params["b_p1"]
    h = bn(h, params["g_pbn1"], params["be_pbn1"])
    h = jnp.maximum(h @ params["w_p2"] + params["b_p2"], 0.0)
    h = bn(h, params["g_pbn2"], params["be_pbn2"])
    pre_phi = h @ params["w_p3"] + params["b_p3"]
    phi = softplus(pre_phi)
    S = phi / jnp.sum(phi, axis=1, keepdims=True)
    h = (x * S) @ params["w_f1"] + params["b_f1"]
    h = bn(h, params["g_bn1"], params["be_bn1"])
    h = jnp.maximum(h @ params["w_f2"] + params["b_f2"], 0.0)
    h = bn(h, params["g_bn2"], params["be_bn2"])
    out = h @ params["w_f4"] + params["b_f4"]
    return out, phi, S, pre_phi


if __name__ == "__main__":
    key = jax.random.PRNGKey(0)
    k_x, k_p = jax.random.split(key)

    B, INPUT_NUM, HIDDEN, OUTPUT_NUM = 8, 16, 200, 10
    x = jax.random.normal(k_x, (B, INPUT_NUM), jnp.float32)
    params = init_params(k_p, INPUT_NUM, OUTPUT_NUM, HIDDEN)

    output, phi, S, pre_phi, extra = switch_mlp_forward(x, params)
    jax.block_until_ready((output, phi, S, pre_phi))

    # sanity check against plain-JAX reference
    ref_out, ref_phi, ref_S, ref_pre = reference_forward(x, params)
    assert output.shape == (B, OUTPUT_NUM)
    assert phi.shape == (B, INPUT_NUM)
    assert S.shape == (B, INPUT_NUM)
    assert pre_phi.shape == (B, INPUT_NUM)
    assert jnp.allclose(output, ref_out, atol=2e-3, rtol=2e-3)
    assert jnp.allclose(phi, ref_phi, atol=2e-3, rtol=2e-3)
    assert jnp.allclose(S, ref_S, atol=2e-3, rtol=2e-3)
    assert jnp.allclose(pre_phi, ref_pre, atol=2e-3, rtol=2e-3)
    assert extra is None

    print("KERNEL_OK")
</pallas_src>

<mosaic_0001>
module attributes {stable_mosaic.version = 11 : i64} {
  func.func @kernel(%arg0: memref<8x128xf32, #tpu.memory_space<vmem>>, %arg1: memref<128x256xf32, #tpu.memory_space<vmem>>, %arg2: memref<256x256xf32, #tpu.memory_space<vmem>>, %arg3: memref<256x128xf32, #tpu.memory_space<vmem>>, %arg4: memref<128x256xf32, #tpu.memory_space<vmem>>, %arg5: memref<256x256xf32, #tpu.memory_space<vmem>>, %arg6: memref<256x128xf32, #tpu.memory_space<vmem>>, %arg7: memref<1x3328xf32, #tpu.memory_space<vmem>>, %arg8: memref<8x512xf32, #tpu.memory_space<vmem>>) attributes {dimension_semantics = [], scalar_prefetch = 0 : i64, scratch_operands = 0 : i64, tpu.core_type = #tpu.core_type<tc>} {
    %c0 = arith.constant 0 : index
    %c0_0 = arith.constant 0 : index
    %0 = vector.load %arg0[%c0, %c0_0] : memref<8x128xf32, #tpu.memory_space<vmem>>, vector<8x128xf32>
    %c0_1 = arith.constant 0 : index
    %c0_2 = arith.constant 0 : index
    %1 = vector.load %arg1[%c0_1, %c0_2] : memref<128x256xf32, #tpu.memory_space<vmem>>, vector<128x256xf32>
    %cst = arith.constant dense<0.000000e+00> : vector<8x256xf32>
    %2 = tpu.matmul %0, %1, %cst {dimension_numbers = #tpu.dot_dimension_numbers<[1], [0], [0], [1], [0, 0, 1, 1], [], []>} : vector<8x128xf32>, vector<128x256xf32>, vector<8x256xf32> -> vector<8x256xf32>
    %c0_3 = arith.constant 0 : index
    %c0_4 = arith.constant 0 : index
    %3 = vector.load %arg7[%c0_3, %c0_4] : memref<1x3328xf32, #tpu.memory_space<vmem>>, vector<1x256xf32>
    %4 = vector.broadcast %3 : vector<1x256xf32> to vector<8x256xf32>
    %5 = arith.addf %2, %4 : vector<8x256xf32>
    %c0_5 = arith.constant 0 : index
    %c256 = arith.constant 256 : index
    %6 = vector.load %arg7[%c0_5, %c256] : memref<1x3328xf32, #tpu.memory_space<vmem>>, vector<1x256xf32>
    %c0_6 = arith.constant 0 : index
    %c512 = arith.constant 512 : index
    %7 = vector.load %arg7[%c0_6, %c512] : memref<1x3328xf32, #tpu.memory_space<vmem>>, vector<1x256xf32>
    %cst_7 = arith.constant dense<0.000000e+00> : vector<256xf32>
    %8 = vector.multi_reduction <add>, %5, %cst_7 [0] : vector<8x256xf32> to vector<256xf32>
    %9 = vector.shape_cast %8 : vector<256xf32> to vector<1x256xf32>
    %cst_8 = arith.constant 8.000000e+00 : f32
    %10 = vector.broadcast %cst_8 : f32 to vector<1x256xf32>
    %11 = arith.divf %9, %10 : vector<1x256xf32>
    %12 = vector.broadcast %11 : vector<1x256xf32> to vector<8x256xf32>
    %13 = arith.subf %5, %12 : vector<8x256xf32>
    %14 = arith.mulf %13, %13 : vector<8x256xf32>
    %cst_9 = arith.constant dense<0.000000e+00> : vector<256xf32>
    %15 = vector.multi_reduction <add>, %14, %cst_9 [0] : vector<8x256xf32> to vector<256xf32>
    %16 = vector.shape_cast %15 : vector<256xf32> to vector<1x256xf32>
    %cst_10 = arith.constant 8.000000e+00 : f32
    %17 = vector.broadcast %cst_10 : f32 to vector<1x256xf32>
    %18 = arith.divf %16, %17 : vector<1x256xf32>
    %19 = vector.broadcast %11 : vector<1x256xf32> to vector<8x256xf32>
    %20 = arith.subf %5, %19 : vector<8x256xf32>
    %cst_11 = arith.constant 9.99999974E-6 : f32
    %21 = vector.broadcast %cst_11 : f32 to vector<1x256xf32>
    %22 = arith.addf %18, %21 : vector<1x256xf32>
    %23 = math.rsqrt %22 : vector<1x256xf32>
    %24 = vector.broadcast %23 : vector<1x256xf32> to vector<8x256xf32>
    %25 = arith.mulf %20, %24 : vector<8x256xf32>
    %26 = vector.broadcast %6 : vector<1x256xf32> to vector<8x256xf32>
    %27 = arith.mulf %25, %26 : vector<8x256xf32>
    %28 = vector.broadcast %7 : vector<1x256xf32> to vector<8x256xf32>
    %29 = arith.addf %27, %28 : vector<8x256xf32>
    %c0_12 = arith.constant 0 : index
    %c0_13 = arith.constant 0 : index
    %30 = vector.load %arg2[%c0_12, %c0_13] : memref<256x256xf32, #tpu.memory_space<vmem>>, vector<256x256xf32>
    %cst_14 = arith.constant dense<0.000000e+00> : vector<8x256xf32>
    %31 = tpu.matmul %29, %30, %cst_14 {dimension_numbers = #tpu.dot_dimension_numbers<[1], [0], [0], [1], [0, 0, 1, 1], [], []>} : vector<8x256xf32>, vector<256x256xf32>, vector<8x256xf32> -> vector<8x256xf32>
    %c0_15 = arith.constant 0 : index
    %c768 = arith.constant 768 : index
    %32 = vector.load %arg7[%c0_15, %c768] : memref<1x3328xf32, #tpu.memory_space<vmem>>, vector<1x256xf32>
    %33 = vector.broadcast %32 : vector<1x256xf32> to vector<8x256xf32>
    %34 = arith.addf %31, %33 : vector<8x256xf32>
    %cst_16 = arith.constant 0.000000e+00 : f32
    %35 = vector.broadcast %cst_16 : f32 to vector<8x256xf32>
    %36 = arith.maximumf %34, %35 : vector<8x256xf32>
    %c0_17 = arith.constant 0 : index
    %c1024 = arith.constant 1024 : index
    %37 = vector.load %arg7[%c0_17, %c1024] : memref<1x3328xf32, #tpu.memory_space<vmem>>, vector<1x256xf32>
    %c0_18 = arith.constant 0 : index
    %c1280 = arith.constant 1280 : index
    %38 = vector.load %arg7[%c0_18, %c1280] : memref<1x3328xf32, #tpu.memory_space<vmem>>, vector<1x256xf32>
    %cst_19 = arith.constant dense<0.000000e+00> : vector<256xf32>
    %39 = vector.multi_reduction <add>, %36, %cst_19 [0] : vector<8x256xf32> to vector<256xf32>
    %40 = vector.shape_cast %39 : vector<256xf32> to vector<1x256xf32>
    %cst_20 = arith.constant 8.000000e+00 : f32
    %41 = vector.broadcast %cst_20 : f32 to vector<1x256xf32>
    %42 = arith.divf %40, %41 : vector<1x256xf32>
    %43 = vector.broadcast %42 : vector<1x256xf32> to vector<8x256xf32>
    %44 = arith.subf %36, %43 : vector<8x256xf32>
    %45 = arith.mulf %44, %44 : vector<8x256xf32>
    %cst_21 = arith.constant dense<0.000000e+00> : vector<256xf32>
    %46 = vector.multi_reduction <add>, %45, %cst_21 [0] : vector<8x256xf32> to vector<256xf32>
    %47 = vector.shape_cast %46 : vector<256xf32> to vector<1x256xf32>
    %cst_22 = arith.constant 8.000000e+00 : f32
    %48 = vector.broadcast %cst_22 : f32 to vector<1x256xf32>
    %49 = arith.divf %47, %48 : vector<1x256xf32>
    %50 = vector.broadcast %42 : vector<1x256xf32> to vector<8x256xf32>
    %51 = arith.subf %36, %50 : vector<8x256xf32>
    %cst_23 = arith.constant 9.99999974E-6 : f32
    %52 = vector.broadcast %cst_23 : f32 to vector<1x256xf32>
    %53 = arith.addf %49, %52 : vector<1x256xf32>
    %54 = math.rsqrt %53 : vector<1x256xf32>
    %55 = vector.broadcast %54 : vector<1x256xf32> to vector<8x256xf32>
    %56 = arith.mulf %51, %55 : vector<8x256xf32>
    %57 = vector.broadcast %37 : vector<1x256xf32> to vector<8x256xf32>
    %58 = arith.mulf %56, %57 : vector<8x256xf32>
    %59 = vector.broadcast %38 : vector<1x256xf32> to vector<8x256xf32>
    %60 = arith.addf %58, %59 : vector<8x256xf32>
    %c0_24 = arith.constant 0 : index
    %c0_25 = arith.constant 0 : index
    %61 = vector.load %arg3[%c0_24, %c0_25] : memref<256x128xf32, #tpu.memory_space<vmem>>, vector<256x128xf32>
    %cst_26 = arith.constant dense<0.000000e+00> : vector<8x128xf32>
    %62 = tpu.matmul %60, %61, %cst_26 {dimension_numbers = #tpu.dot_dimension_numbers<[1], [0], [0], [1], [0, 0, 1, 1], [], []>} : vector<8x256xf32>, vector<256x128xf32>, vector<8x128xf32> -> vector<8x128xf32>
    %c0_27 = arith.constant 0 : index
    %c1536 = arith.constant 1536 : index
    %63 = vector.load %arg7[%c0_27, %c1536] : memref<1x3328xf32, #tpu.memory_space<vmem>>, vector<1x128xf32>
    %64 = vector.broadcast %63 : vector<1x128xf32> to vector<8x128xf32>
    %65 = arith.addf %62, %64 : vector<8x128xf32>
    %cst_28 = arith.constant 2.000000e+01 : f32
    %66 = vector.broadcast %cst_28 : f32 to vector<8x128xf32>
    %67 = arith.cmpf ogt, %65, %66 : vector<8x128xf32>
    %cst_29 = arith.constant 2.000000e+01 : f32
    %68 = vector.broadcast %cst_29 : f32 to vector<8x128xf32>
    %69 = arith.minimumf %65, %68 : vector<8x128xf32>
    %70 = math.exp %69 : vector<8x128xf32>
    %71 = math.log1p %70 : vector<8x128xf32>
    %72 = arith.select %67, %65, %71 : vector<8x128xi1>, vector<8x128xf32>
    %73 = tpu.iota {dimensions = array<i32: 1>} : vector<1x128xi32>
    %c16_i32 = arith.constant 16 : i32
    %74 = vector.broadcast %c16_i32 : i32 to vector<1x128xi32>
    %75 = arith.cmpi slt, %73, %74 : vector<1x128xi32>
    %cst_30 = arith.constant 0.000000e+00 : f32
    %76 = vector.shape_cast %75 : vector<1x128xi1> to vector<1x128xi1>
    %77 = vector.broadcast %76 : vector<1x128xi1> to vector<8x128xi1>
    %78 = vector.broadcast %cst_30 : f32 to vector<8x128xf32>
    %79 = arith.select %77, %72, %78 : vector<8x128xi1>, vector<8x128xf32>
    %cst_31 = arith.constant dense<0.000000e+00> : vector<8xf32>
    %80 = vector.multi_reduction <add>, %79, %cst_31 [1] : vector<8x128xf32> to vector<8xf32>
    %81 = vector.shape_cast %80 : vector<8xf32> to vector<8x1xf32>
    %82 = tpu.reciprocal %81 {approx = true} : vector<8x1xf32> -> vector<8x1xf32>
    %83 = vector.broadcast %82 : vector<8x1xf32> to vector<8x128xf32>
    %84 = arith.mulf %79, %83 : vector<8x128xf32>
    %85 = arith.mulf %0, %84 : vector<8x128xf32>
    %c0_32 = arith.constant 0 : index
    %c0_33 = arith.constant 0 : index
    %86 = vector.load %arg4[%c0_32, %c0_33] : memref<128x256xf32, #tpu.memory_space<vmem>>, vector<128x256xf32>
    %cst_34 = arith.constant dense<0.000000e+00> : vector<8x256xf32>
    %87 = tpu.matmul %85, %86, %cst_34 {dimension_numbers = #tpu.dot_dimension_numbers<[1], [0], [0], [1], [0, 0, 1, 1], [], []>} : vector<8x128xf32>, vector<128x256xf32>, vector<8x256xf32> -> vector<8x256xf32>
    %c0_35 = arith.constant 0 : index
    %c1664 = arith.constant 1664 : index
    %88 = vector.load %arg7[%c0_35, %c1664] : memref<1x3328xf32, #tpu.memory_space<vmem>>, vector<1x256xf32>
    %89 = vector.broadcast %88 : vector<1x256xf32> to vector<8x256xf32>
    %90 = arith.addf %87, %89 : vector<8x256xf32>
    %c0_36 = arith.constant 0 : index
    %c1920 = arith.constant 1920 : index
    %91 = vector.load %arg7[%c0_36, %c1920] : memref<1x3328xf32, #tpu.memory_space<vmem>>, vector<1x256xf32>
    %c0_37 = arith.constant 0 : index
    %c2176 = arith.constant 2176 : index
    %92 = vector.load %arg7[%c0_37, %c2176] : memref<1x3328xf32, #tpu.memory_space<vmem>>, vector<1x256xf32>
    %cst_38 = arith.constant dense<0.000000e+00> : vector<256xf32>
    %93 = vector.multi_reduction <add>, %90, %cst_38 [0] : vector<8x256xf32> to vector<256xf32>
    %94 = vector.shape_cast %93 : vector<256xf32> to vector<1x256xf32>
    %cst_39 = arith.constant 8.000000e+00 : f32
    %95 = vector.broadcast %cst_39 : f32 to vector<1x256xf32>
    %96 = arith.divf %94, %95 : vector<1x256xf32>
    %97 = vector.broadcast %96 : vector<1x256xf32> to vector<8x256xf32>
    %98 = arith.subf %90, %97 : vector<8x256xf32>
    %99 = arith.mulf %98, %98 : vector<8x256xf32>
    %cst_40 = arith.constant dense<0.000000e+00> : vector<256xf32>
    %100 = vector.multi_reduction <add>, %99, %cst_40 [0] : vector<8x256xf32> to vector<256xf32>
    %101 = vector.shape_cast %100 : vector<256xf32> to vector<1x256xf32>
    %cst_41 = arith.constant 8.000000e+00 : f32
    %102 = vector.broadcast %cst_41 : f32 to vector<1x256xf32>
    %103 = arith.divf %101, %102 : vector<1x256xf32>
    %104 = vector.broadcast %96 : vector<1x256xf32> to vector<8x256xf32>
    %105 = arith.subf %90, %104 : vector<8x256xf32>
    %cst_42 = arith.constant 9.99999974E-6 : f32
    %106 = vector.broadcast %cst_42 : f32 to vector<1x256xf32>
    %107 = arith.addf %103, %106 : vector<1x256xf32>
    %108 = math.rsqrt %107 : vector<1x256xf32>
    %109 = vector.broadcast %108 : vector<1x256xf32> to vector<8x256xf32>
    %110 = arith.mulf %105, %109 : vector<8x256xf32>
    %111 = vector.broadcast %91 : vector<1x256xf32> to vector<8x256xf32>
    %112 = arith.mulf %110, %111 : vector<8x256xf32>
    %113 = vector.broadcast %92 : vector<1x256xf32> to vector<8x256xf32>
    %114 = arith.addf %112, %113 : vector<8x256xf32>
    %c0_43 = arith.constant 0 : index
    %c0_44 = arith.constant 0 : index
    %115 = vector.load %arg5[%c0_43, %c0_44] : memref<256x256xf32, #tpu.memory_space<vmem>>, vector<256x256xf32>
    %cst_45 = arith.constant dense<0.000000e+00> : vector<8x256xf32>
    %116 = tpu.matmul %114, %115, %cst_45 {dimension_numbers = #tpu.dot_dimension_numbers<[1], [0], [0], [1], [0, 0, 1, 1], [], []>} : vector<8x256xf32>, vector<256x256xf32>, vector<8x256xf32> -> vector<8x256xf32>
    %c0_46 = arith.constant 0 : index
    %c2432 = arith.constant 2432 : index
    %117 = vector.load %arg7[%c0_46, %c2432] : memref<1x3328xf32, #tpu.memory_space<vmem>>, vector<1x256xf32>
    %118 = vector.broadcast %117 : vector<1x256xf32> to vector<8x256xf32>
    %119 = arith.addf %116, %118 : vector<8x256xf32>
    %cst_47 = arith.constant 0.000000e+00 : f32
    %120 = vector.broadcast %cst_47 : f32 to vector<8x256xf32>
    %121 = arith.maximumf %119, %120 : vector<8x256xf32>
    %c0_48 = arith.constant 0 : index
    %c2688 = arith.constant 2688 : index
    %122 = vector.load %arg7[%c0_48, %c2688] : memref<1x3328xf32, #tpu.memory_space<vmem>>, vector<1x256xf32>
    %c0_49 = arith.constant 0 : index
    %c2944 = arith.constant 2944 : index
    %123 = vector.load %arg7[%c0_49, %c2944] : memref<1x3328xf32, #tpu.memory_space<vmem>>, vector<1x256xf32>
    %cst_50 = arith.constant dense<0.000000e+00> : vector<256xf32>
    %124 = vector.multi_reduction <add>, %121, %cst_50 [0] : vector<8x256xf32> to vector<256xf32>
    %125 = vector.shape_cast %124 : vector<256xf32> to vector<1x256xf32>
    %cst_51 = arith.constant 8.000000e+00 : f32
    %126 = vector.broadcast %cst_51 : f32 to vector<1x256xf32>
    %127 = arith.divf %125, %126 : vector<1x256xf32>
    %128 = vector.broadcast %127 : vector<1x256xf32> to vector<8x256xf32>
    %129 = arith.subf %121, %128 : vector<8x256xf32>
    %130 = arith.mulf %129, %129 : vector<8x256xf32>
    %cst_52 = arith.constant dense<0.000000e+00> : vector<256xf32>
    %131 = vector.multi_reduction <add>, %130, %cst_52 [0] : vector<8x256xf32> to vector<256xf32>
    %132 = vector.shape_cast %131 : vector<256xf32> to vector<1x256xf32>
    %cst_53 = arith.constant 8.000000e+00 : f32
    %133 = vector.broadcast %cst_53 : f32 to vector<1x256xf32>
    %134 = arith.divf %132, %133 : vector<1x256xf32>
    %135 = vector.broadcast %127 : vector<1x256xf32> to vector<8x256xf32>
    %136 = arith.subf %121, %135 : vector<8x256xf32>
    %cst_54 = arith.constant 9.99999974E-6 : f32
    %137 = vector.broadcast %cst_54 : f32 to vector<1x256xf32>
    %138 = arith.addf %134, %137 : vector<1x256xf32>
    %139 = math.rsqrt %138 : vector<1x256xf32>
    %140 = vector.broadcast %139 : vector<1x256xf32> to vector<8x256xf32>
    %141 = arith.mulf %136, %140 : vector<8x256xf32>
    %142 = vector.broadcast %122 : vector<1x256xf32> to vector<8x256xf32>
    %143 = arith.mulf %141, %142 : vector<8x256xf32>
    %144 = vector.broadcast %123 : vector<1x256xf32> to vector<8x256xf32>
    %145 = arith.addf %143, %144 : vector<8x256xf32>
    %c0_55 = arith.constant 0 : index
    %c0_56 = arith.constant 0 : index
    %146 = vector.load %arg6[%c0_55, %c0_56] : memref<256x128xf32, #tpu.memory_space<vmem>>, vector<256x128xf32>
    %cst_57 = arith.constant dense<0.000000e+00> : vector<8x128xf32>
    %147 = tpu.matmul %145, %146, %cst_57 {dimension_numbers = #tpu.dot_dimension_numbers<[1], [0], [0], [1], [0, 0, 1, 1], [], []>} : vector<8x256xf32>, vector<256x128xf32>, vector<8x128xf32> -> vector<8x128xf32>
    %c0_58 = arith.constant 0 : index
    %c3200 = arith.constant 3200 : index
    %148 = vector.load %arg7[%c0_58, %c3200] : memref<1x3328xf32, #tpu.memory_space<vmem>>, vector<1x128xf32>
    %149 = vector.broadcast %148 : vector<1x128xf32> to vector<8x128xf32>
    %150 = arith.addf %147, %149 : vector<8x128xf32>
    %c0_59 = arith.constant 0 : index
    %c0_60 = arith.constant 0 : index
    %151 = vector.load %arg8[%c0_59, %c0_60] : memref<8x512xf32, #tpu.memory_space<vmem>>, vector<8x128xf32>
    tpu.vector_store %arg8[%c0_59, %c0_60], %150 {strides = array<i32>} : memref<8x512xf32, #tpu.memory_space<vmem>>, vector<8x128xf32>,
    %c0_61 = arith.constant 0 : index
    %c128 = arith.constant 128 : index
    %152 = vector.load %arg8[%c0_61, %c128] : memref<8x512xf32, #tpu.memory_space<vmem>>, vector<8x128xf32>
    tpu.vector_store %arg8[%c0_61, %c128], %79 {strides = array<i32>} : memref<8x512xf32, #tpu.memory_space<vmem>>, vector<8x128xf32>,
    %c0_62 = arith.constant 0 : index
    %c256_63 = arith.constant 256 : index
    %153 = vector.load %arg8[%c0_62, %c256_63] : memref<8x512xf32, #tpu.memory_space<vmem>>, vector<8x128xf32>
    tpu.vector_store %arg8[%c0_62, %c256_63], %84 {strides = array<i32>} : memref<8x512xf32, #tpu.memory_space<vmem>>, vector<8x128xf32>,
    %c0_64 = arith.constant 0 : index
    %c384 = arith.constant 384 : index
    %154 = vector.load %arg8[%c0_64, %c384] : memref<8x512xf32, #tpu.memory_space<vmem>>, vector<8x128xf32>
    tpu.vector_store %arg8[%c0_64, %c384], %65 {strides = array<i32>} : memref<8x512xf32, #tpu.memory_space<vmem>>, vector<8x128xf32>,
    return
  }
}

</mosaic_0001>

<llo_original>
// kernel: tpu_custom_call.1
$region0: #{tpu_custom_call.1}
  #allocation0 [shape = 'u32[]', space=smem, size = 0x4, offset = 0x4, fixed_abs, tag = 'smem constant byte address 0x4 - core index']
  #allocation1 [shape = 'u32[144,128]{1,0:T(1,128)}', space=vmem, size = 0x12000, scoped, tag = 'internal scratch']
  %s0 = inlined_call_operand.hbm [shape: f32[8,128], index: 0, kind: input, shape index: {}]
  %s1 = inlined_call_operand.hbm [shape: f32[128,256], index: 1, kind: input, shape index: {}]
  %s2 = inlined_call_operand.hbm [shape: f32[256,256], index: 2, kind: input, shape index: {}]
  %s3 = inlined_call_operand.hbm [shape: f32[256,128], index: 3, kind: input, shape index: {}]
  %s4 = inlined_call_operand.hbm [shape: f32[128,256], index: 4, kind: input, shape index: {}]
  %s5 = inlined_call_operand.hbm [shape: f32[256,256], index: 5, kind: input, shape index: {}]
  %s6 = inlined_call_operand.hbm [shape: f32[256,128], index: 6, kind: input, shape index: {}]
  %s7 = inlined_call_operand.vmem [shape: f32[1,3328], index: 7, kind: input, shape index: {}]
  %s8 = inlined_call_operand.hbm [shape: f32[8,512], index: 8, kind: output, shape index: {}]
  %s9 = sld [smem:[#allocation0]]
  $region70: #{tpu_custom_call.1} parent=0
    _
  %s11 = ssub.s32 1, %s9
  %s12 = scalar_select 0, %s11, %s9
  $region1: #{tpu_custom_call.1} parent=0
    #allocation2 [shape = 'u8[4096]{0}', space=vmem, size = 0x1000, scoped, tag = 'input window, operand 0, single buffered']
    #allocation3 [shape = 's32[1]{0}', space=sflag, size = 0x4, scoped, tag = 'scoped memory for tpu_custom_call.1']
    #allocation4 [shape = 's32[1]{0}', space=sflag, size = 0x4, scoped, tag = 'scoped memory for tpu_custom_call.1']
    #allocation5 [shape = 'u8[131072]{0}', space=vmem, size = 0x20000, scoped, tag = 'input window, operand 1, single buffered']
    #allocation6 [shape = 's32[1]{0}', space=sflag, size = 0x4, scoped, tag = 'scoped memory for tpu_custom_call.1']
    #allocation7 [shape = 'u8[262144]{0}', space=vmem, size = 0x40000, scoped, tag = 'input window, operand 2, single buffered']
    #allocation8 [shape = 'u8[131072]{0}', space=vmem, size = 0x20000, scoped, tag = 'input window, operand 3, single buffered']
    #allocation9 [shape = 's32[1]{0}', space=sflag, size = 0x4, scoped, tag = 'scoped memory for tpu_custom_call.1']
    #allocation10 [shape = 'u8[131072]{0}', space=vmem, size = 0x20000, scoped, tag = 'input window, operand 4, single buffered']
    #allocation11 [shape = 'u8[262144]{0}', space=vmem, size = 0x40000, scoped, tag = 'input window, operand 5, single buffered']
    #allocation12 [shape = 's32[1]{0}', space=sflag, size = 0x4, scoped, tag = 'scoped memory for tpu_custom_call.1']
    #allocation13 [shape = 'u8[131072]{0}', space=vmem, size = 0x20000, scoped, tag = 'input window, operand 6, single buffered']
    #allocation14 [shape = 'u8[16384]{0}', space=vmem, size = 0x4000, scoped, tag = 'output window, operand 0, single buffered']
    %13 = vsyncpa [#allocation3], 0
    %14 = vsyncpa [#allocation6], 0
    %15 = vsyncpa [#allocation9], 0
    %16 = vsyncpa [#allocation12], 0
    %17 = vsyncpa [#allocation4], 0
    // Predicated region
    $region2: #{tpu_custom_call.1} parent=1 // pred_check
      _
    $region3: #{tpu_custom_call.1} parent=1 // pred_check_branch
      %19 = sbr.rel (0) target = $region5
    $region4: #{tpu_custom_call.1} parent=1 // pred_region
      %s21 = ssub.s32 128, 128
      %22 = vsyncadd [#allocation3], %s21
      %s24 = sshll.u32 [#allocation2], 4
      %s25 = int_to_ptr.vmem [resolvable:$true] %s24
      %27 = dma.hbm_to_vmem [thread:$0]  %s0, 128, %s25, [#allocation3]
    $region5: #{tpu_custom_call.1} parent=1 // pred_fallthru
      _
    // Predicated region
    $region6: #{tpu_custom_call.1} parent=1 // pred_check
      _
    $region7: #{tpu_custom_call.1} parent=1 // pred_check_branch
      %29 = sbr.rel (0) target = $region9
    $region8: #{tpu_custom_call.1} parent=1 // pred_region
      %s31 = ssub.s32 4096, 4096
      %32 = vsyncadd [#allocation6], %s31
      %s33 = sshll.u32 [#allocation5], 4
      %s34 = int_to_ptr.vmem [resolvable:$true] %s33
      %39 = dma.hbm_to_vmem [thread:$0]  %s1, 4096, %s34, [#allocation6], 256, 256, 16
    $region9: #{tpu_custom_call.1} parent=1 // pred_fallthru
      _
    // Predicated region
    $region10: #{tpu_custom_call.1} parent=1 // pred_check
      _
    $region11: #{tpu_custom_call.1} parent=1 // pred_check_branch
      %41 = sbr.rel (0) target = $region13
    $region12: #{tpu_custom_call.1} parent=1 // pred_region
      %s43 = ssub.s32 8192, 8192
      %44 = vsyncadd [#allocation6], %s43
      %s45 = sshll.u32 [#allocation7], 4
      %s46 = int_to_ptr.vmem [resolvable:$true] %s45
      %51 = dma.hbm_to_vmem [thread:$0]  %s2, 8192, %s46, [#allocation6], 256, 256, 16
    $region13: #{tpu_custom_call.1} parent=1 // pred_fallthru
      _
    // Predicated region
    $region14: #{tpu_custom_call.1} parent=1 // pred_check
      _
    $region15: #{tpu_custom_call.1} parent=1 // pred_check_branch
      %53 = sbr.rel (0) target = $region17
    $region16: #{tpu_custom_call.1} parent=1 // pred_region
      %s55 = ssub.s32 4096, 4096
      %56 = vsyncadd [#allocation9], %s55
      %s57 = sshll.u32 [#allocation8], 4
      %s58 = int_to_ptr.vmem [resolvable:$true] %s57
      %63 = dma.hbm_to_vmem [thread:$0]  %s3, 4096, %s58, [#allocation9], 128, 128, 8
    $region17: #{tpu_custom_call.1} parent=1 // pred_fallthru
      _
    // Predicated region
    $region18: #{tpu_custom_call.1} parent=1 // pred_check
      _
    $region19: #{tpu_custom_call.1} parent=1 // pred_check_branch
      %65 = sbr.rel (0) target = $region21
    $region20: #{tpu_custom_call.1} parent=1 // pred_region
      %s67 = ssub.s32 4096, 4096
      %68 = vsyncadd [#allocation9], %s67
      %s69 = sshll.u32 [#allocation10], 4
      %s70 = int_to_ptr.vmem [resolvable:$true] %s69
      %75 = dma.hbm_to_vmem [thread:$0]  %s4, 4096, %s70, [#allocation9], 256, 256, 16
    $region21: #{tpu_custom_call.1} parent=1 // pred_fallthru
      _
    // Predicated region
    $region22: #{tpu_custom_call.1} parent=1 // pred_check
      _
    $region23: #{tpu_custom_call.1} parent=1 // pred_check_branch
      %77 = sbr.rel (0) target = $region25
    $region24: #{tpu_custom_call.1} parent=1 // pred_region
      %s79 = ssub.s32 8192, 8192
      %80 = vsyncadd [#allocation12], %s79
      %s81 = sshll.u32 [#allocation11], 4
      %s82 = int_to_ptr.vmem [resolvable:$true] %s81
      %87 = dma.hbm_to_vmem [thread:$0]  %s5, 8192, %s82, [#allocation12], 256, 256, 16
    $region25: #{tpu_custom_call.1} parent=1 // pred_fallthru
      _
    // Predicated region
    $region26: #{tpu_custom_call.1} parent=1 // pred_check
      _
    $region27: #{tpu_custom_call.1} parent=1 // pred_check_branch
      %89 = sbr.rel (0) target = $region29
    $region28: #{tpu_custom_call.1} parent=1 // pred_region
      %s91 = ssub.s32 4096, 4096
      %92 = vsyncadd [#allocation12], %s91
      %s93 = sshll.u32 [#allocation13], 4
      %s94 = int_to_ptr.vmem [resolvable:$true] %s93
      %99 = dma.hbm_to_vmem [thread:$0]  %s6, 4096, %s94, [#allocation12], 128, 128, 8
    $region29: #{tpu_custom_call.1} parent=1 // pred_fallthru
      _
    // Predicated region
    $region30: #{tpu_custom_call.1} parent=1 // pred_check
      _
    $region31: #{tpu_custom_call.1} parent=1 // pred_check_branch
      %101 = sbr.rel (0) target = $region33
    $region32: #{tpu_custom_call.1} parent=1 // pred_region
      _
    $region33: #{tpu_custom_call.1} parent=1 // pred_fallthru
      _
    // Predicated region
    $region34: #{tpu_custom_call.1} parent=1 // pred_check
      _
    $region35: #{tpu_custom_call.1} parent=1 // pred_check_branch
      %103 = sbr.rel (0) target = $region37
    $region36: #{tpu_custom_call.1} parent=1 // pred_region
      %104 = dma.done [#allocation3], 128
    $region37: #{tpu_custom_call.1} parent=1 // pred_fallthru
      _
    // Predicated region
    $region38: #{tpu_custom_call.1} parent=1 // pred_check
      _
    $region39: #{tpu_custom_call.1} parent=1 // pred_check_branch
      %106 = sbr.rel (0) target = $region41
    $region40: #{tpu_custom_call.1} parent=1 // pred_region
      %107 = dma.done [#allocation6], 4096
    $region41: #{tpu_custom_call.1} parent=1 // pred_fallthru
      _
    // Predicated region
    $region42: #{tpu_custom_call.1} parent=1 // pred_check
      _
    $region43: #{tpu_custom_call.1} parent=1 // pred_check_branch
      %109 = sbr.rel (0) target = $region45
    $region44: #{tpu_custom_call.1} parent=1 // pred_region
      %110 = dma.done [#allocation6], 8192
    $region45: #{tpu_custom_call.1} parent=1 // pred_fallthru
      _
    // Predicated region
    $region46: #{tpu_custom_call.1} parent=1 // pred_check
      _
    $region47: #{tpu_custom_call.1} parent=1 // pred_check_branch
      %112 = sbr.rel (0) target = $region49
    $region48: #{tpu_custom_call.1} parent=1 // pred_region
      %113 = dma.done [#allocation9], 4096
    $region49: #{tpu_custom_call.1} parent=1 // pred_fallthru
      _
    // Predicated region
    $region50: #{tpu_custom_call.1} parent=1 // pred_check
      _
    $region51: #{tpu_custom_call.1} parent=1 // pred_check_branch
      %115 = sbr.rel (0) target = $region53
    $region52: #{tpu_custom_call.1} parent=1 // pred_region
      %116 = dma.done [#allocation9], 4096
    $region53: #{tpu_custom_call.1} parent=1 // pred_fallthru
      _
    // Predicated region
    $region54: #{tpu_custom_call.1} parent=1 // pred_check
      _
    $region55: #{tpu_custom_call.1} parent=1 // pred_check_branch
      %118 = sbr.rel (0) target = $region57
    $region56: #{tpu_custom_call.1} parent=1 // pred_region
      %119 = dma.done [#allocation12], 8192
    $region57: #{tpu_custom_call.1} parent=1 // pred_fallthru
      _
    // Predicated region
    $region58: #{tpu_custom_call.1} parent=1 // pred_check
      _
    $region59: #{tpu_custom_call.1} parent=1 // pred_check_branch
      %121 = sbr.rel (0) target = $region61
    $region60: #{tpu_custom_call.1} parent=1 // pred_region
      %122 = dma.done [#allocation12], 4096
    $region61: #{tpu_custom_call.1} parent=1 // pred_fallthru
      _
    %v123 = vld [vmem:[#allocation2] sm:$0xff]
    %v124 = vld [vmem:[#allocation5] sm:$0xff]
    %v125 = vld [vmem:[#allocation5 + $0x8] sm:$0xff]
    %v126 = vld [vmem:[#allocation5 + $0x10] sm:$0xff]
    %v127 = vld [vmem:[#allocation5 + $0x18] sm:$0xff]
    %v128 = vld [vmem:[#allocation5 + $0x20] sm:$0xff]
    %v129 = vld [vmem:[#allocation5 + $0x28] sm:$0xff]
    %v130 = vld [vmem:[#allocation5 + $0x30] sm:$0xff]
    %v131 = vld [vmem:[#allocation5 + $0x38] sm:$0xff]
    %v132 = vld [vmem:[#allocation5 + $0x40] sm:$0xff]
    %v133 = vld [vmem:[#allocation5 + $0x48] sm:$0xff]
    %v134 = vld [vmem:[#allocation5 + $0x50] sm:$0xff]
    %v135 = vld [vmem:[#allocation5 + $0x58] sm:$0xff]
    %v136 = vld [vmem:[#allocation5 + $0x60] sm:$0xff]
    %v137 = vld [vmem:[#allocation5 + $0x68] sm:$0xff]
    %v138 = vld [vmem:[#allocation5 + $0x70] sm:$0xff]
    %v139 = vld [vmem:[#allocation5 + $0x78] sm:$0xff]
    %v140 = vld [vmem:[#allocation5 + $0x80] sm:$0xff]
    %v141 = vld [vmem:[#allocation5 + $0x88] sm:$0xff]
    %v142 = vld [vmem:[#allocation5 + $0x90] sm:$0xff]
    %v143 = vld [vmem:[#allocation5 + $0x98] sm:$0xff]
    %v144 = vld [vmem:[#allocation5 + $0xa0] sm:$0xff]
    %v145 = vld [vmem:[#allocation5 + $0xa8] sm:$0xff]
    %v146 = vld [vmem:[#allocation5 + $0xb0] sm:$0xff]
    %v147 = vld [vmem:[#allocation5 + $0xb8] sm:$0xff]
    %v148 = vld [vmem:[#allocation5 + $0xc0] sm:$0xff]
    %v149 = vld [vmem:[#allocation5 + $0xc8] sm:$0xff]
    %v150 = vld [vmem:[#allocation5 + $0xd0] sm:$0xff]
    %v151 = vld [vmem:[#allocation5 + $0xd8] sm:$0xff]
    %v152 = vld [vmem:[#allocation5 + $0xe0] sm:$0xff]
    %v153 = vld [vmem:[#allocation5 + $0xe8] sm:$0xff]
    %v154 = vld [vmem:[#allocation5 + $0xf0] sm:$0xff]
    %v155 = vld [vmem:[#allocation5 + $0xf8] sm:$0xff]
    %v156 = vld [vmem:[%s7] sm:$0x3]
    %v158 = vlaneseq
    %v159 = vshrl.u32 %v158, 7
    %v160 = vsub.s32 0, %v159
    %v161 = vrot.slane %v156, %v160
    %v162 = vlaneseq
    %v163 = vshrl.u32 %v162, 7
    %v164 = vsub.s32 1, %v163
    %v165 = vrot.slane %v156, %v164
    %168 = vmatprep.subr.mxu0 %v125
    %169 = vmatpush1.msra.mxu0 %v124
    %170 = vmatprep.subr.mxu0 %v127
    %171 = vmatpush1.msra.mxu0 %v126
    %172 = vmatprep.subr.mxu0 %v129
    %173 = vmatpush1.msra.mxu0 %v128
    %174 = vmatprep.subr.mxu0 %v131
    %175 = vmatpush1.msra.mxu0 %v130
    %176 = vmatprep.subr.mxu0 %v133
    %177 = vmatpush1.msra.mxu0 %v132
    %178 = vmatprep.subr.mxu0 %v135
    %179 = vmatpush1.msra.mxu0 %v134
    %180 = vmatprep.subr.mxu0 %v137
    %181 = vmatpush1.msra.mxu0 %v136
    %182 = vmatprep.subr.mxu0 %v139
    %183 = vmatpush1.msra.mxu0 %v138
    %184 = vmatprep.subr.mxu0 %v141
    %185 = vmatpush1.msra.mxu0 %v140
    %186 = vmatprep.subr.mxu0 %v143
    %187 = vmatpush1.msra.mxu0 %v142
    %188 = vmatprep.subr.mxu0 %v145
    %189 = vmatpush1.msra.mxu0 %v144
    %190 = vmatprep.subr.mxu0 %v147
    %191 = vmatpush1.msra.mxu0 %v146
    %192 = vmatprep.subr.mxu0 %v149
    %193 = vmatpush1.msra.mxu0 %v148
    %194 = vmatprep.subr.mxu0 %v151
    %195 = vmatpush1.msra.mxu0 %v150
    %196 = vmatprep.subr.mxu0 %v153
    %197 = vmatpush1.msra.mxu0 %v152
    %198 = vmatprep.subr.mxu0 %v155
    %199 = vmatpush1.msra.mxu0 %v154
    %200 = vmatprep.subr.mxu0 0.0
    %201 = vmatpush1.msra.mxu0 0.0
    %202 = vmatprep.subr.mxu0 0.0
    %203 = vmatpush1.msra.mxu0 0.0
    %204 = vmatprep.subr.mxu0 0.0
    %205 = vmatpush1.msra.mxu0 0.0
    %206 = vmatprep.subr.mxu0 0.0
    %207 = vmatpush1.msra.mxu0 0.0
    %208 = vmatprep.subr.mxu0 0.0
    %209 = vmatpush1.msra.mxu0 0.0
    %210 = vmatprep.subr.mxu0 0.0
    %211 = vmatpush1.msra.mxu0 0.0
    %212 = vmatprep.subr.mxu0 0.0
    %213 = vmatpush1.msra.mxu0 0.0
    %214 = vmatprep.subr.mxu0 0.0
    %215 = vmatpush1.msra.mxu0 0.0
    %216 = vmatprep.subr.mxu0 0.0
    %217 = vmatpush1.msra.mxu0 0.0
    %218 = vmatprep.subr.mxu0 0.0
    %219 = vmatpush1.msra.mxu0 0.0
    %220 = vmatprep.subr.mxu0 0.0
    %221 = vmatpush1.msra.mxu0 0.0
    %222 = vmatprep.subr.mxu0 0.0
    %223 = vmatpush1.msra.mxu0 0.0
    %224 = vmatprep.subr.mxu0 0.0
    %225 = vmatpush1.msra.mxu0 0.0
    %226 = vmatprep.subr.mxu0 0.0
    %227 = vmatpush1.msra.mxu0 0.0
    %228 = vmatprep.subr.mxu0 0.0
    %229 = vmatpush1.msra.mxu0 0.0
    %230 = vmatprep.subr.mxu0 0.0
    %231 = vmatpush1.msra.mxu0 0.0
    %232 = vmatprep.mubr.f32.mxu0 0.0
    %233 = vmatmul.mubr.f32.gmra.mrb[0].mxu0 %v123
    %v234 = vpop.f32.mrb[0].mxu0
    %v235 = vadd.f32 %v161, %v234
    %v236 = vpop.f32.mrb[0].mxu0
    %v237 = vadd.f32 %v165, %v236
    %238 = vdwg.mxu0
    %v239 = vld [vmem:[%s7 + $0x2] sm:$0x3]
    %v240 = vld [vmem:[%s7 + $0x4] sm:$0x3]
    %v241 = vrot.slane %v235, 4
    %v242 = vadd.f32 %v235, %v241
    %v243 = vrot.slane %v242, 2
    %v244 = vadd.f32 %v242, %v243
    %v245 = vrot.slane %v244, 1
    %v246 = vadd.f32 %v244, %v245
    %v247 = vrot.slane %v237, 4
    %v248 = vadd.f32 %v237, %v247
    %v249 = vrot.slane %v248, 2
    %v250 = vadd.f32 %v248, %v249
    %v251 = vrot.slane %v250, 1
    %v252 = vadd.f32 %v250, %v251
    %v253 = vrcp.pop 8.0
    %v254 = vmul.f32 %v246, %v253
    %v255 = vmul.f32 %v252, %v253
    %v256 = vsub.f32 %v235, %v254
    %v257 = vsub.f32 %v237, %v255
    %v258 = vmul.f32 %v256, %v256
    %v259 = vmul.f32 %v257, %v257
    %v260 = vrot.slane %v258, 4
    %v261 = vadd.f32 %v258, %v260
    %v262 = vrot.slane %v261, 2
    %v263 = vadd.f32 %v261, %v262
    %v264 = vrot.slane %v263, 1
    %v265 = vadd.f32 %v263, %v264
    %v266 = vrot.slane %v259, 4
    %v267 = vadd.f32 %v259, %v266
    %v268 = vrot.slane %v267, 2
    %v269 = vadd.f32 %v267, %v268
    %v270 = vrot.slane %v269, 1
    %v271 = vadd.f32 %v269, %v270
    %v272 = vmul.f32 %v265, %v253
    %v273 = vmul.f32 %v271, %v253
    %v274 = vadd.f32 %v272, 1e-05
    %v275 = vadd.f32 %v273, 1e-05
    %v276 = vrsqrt.pop %v274
    %v277 = vrsqrt.pop %v275
    %v278 = vmul.f32 %v256, %v276
    %v279 = vmul.f32 %v257, %v277
    %v281 = vlaneseq
    %v282 = vshrl.u32 %v281, 7
    %v283 = vsub.s32 0, %v282
    %v284 = vrot.slane %v239, %v283
    %v285 = vlaneseq
    %v286 = vshrl.u32 %v285, 7
    %v287 = vsub.s32 1, %v286
    %v288 = vrot.slane %v239, %v287
    %v291 = vmul.f32 %v278, %v284
    %v292 = vmul.f32 %v279, %v288
    %v294 = vlaneseq
    %v295 = vshrl.u32 %v294, 7
    %v296 = vsub.s32 0, %v295
    %v297 = vrot.slane %v240, %v296
    %v298 = vlaneseq
    %v299 = vshrl.u32 %v298, 7
    %v300 = vsub.s32 1, %v299
    %v301 = vrot.slane %v240, %v300
    %v304 = vadd.f32 %v291, %v297
    %v305 = vadd.f32 %v292, %v301
    %v306 = vld [vmem:[#allocation7] sm:$0xff]
    %v307 = vld [vmem:[#allocation7 + $0x8] sm:$0xff]
    %v308 = vld [vmem:[#allocation7 + $0x10] sm:$0xff]
    %v309 = vld [vmem:[#allocation7 + $0x18] sm:$0xff]
    %v310 = vld [vmem:[#allocation7 + $0x20] sm:$0xff]
    %v311 = vld [vmem:[#allocation7 + $0x28] sm:$0xff]
    %v312 = vld [vmem:[#allocation7 + $0x30] sm:$0xff]
    %v313 = vld [vmem:[#allocation7 + $0x38] sm:$0xff]
    %v314 = vld [vmem:[#allocation7 + $0x40] sm:$0xff]
    %v315 = vld [vmem:[#allocation7 + $0x48] sm:$0xff]
    %v316 = vld [vmem:[#allocation7 + $0x50] sm:$0xff]
    %v317 = vld [vmem:[#allocation7 + $0x58] sm:$0xff]
    %v318 = vld [vmem:[#allocation7 + $0x60] sm:$0xff]
    %v319 = vld [vmem:[#allocation7 + $0x68] sm:$0xff]
    %v320 = vld [vmem:[#allocation7 + $0x70] sm:$0xff]
    %v321 = vld [vmem:[#allocation7 + $0x78] sm:$0xff]
    %v322 = vld [vmem:[#allocation7 + $0x80] sm:$0xff]
    %v323 = vld [vmem:[#allocation7 + $0x88] sm:$0xff]
    %v324 = vld [vmem:[#allocation7 + $0x90] sm:$0xff]
    %v325 = vld [vmem:[#allocation7 + $0x98] sm:$0xff]
    %v326 = vld [vmem:[#allocation7 + $0xa0] sm:$0xff]
    %v327 = vld [vmem:[#allocation7 + $0xa8] sm:$0xff]
    %v328 = vld [vmem:[#allocation7 + $0xb0] sm:$0xff]
    %v329 = vld [vmem:[#allocation7 + $0xb8] sm:$0xff]
    %v330 = vld [vmem:[#allocation7 + $0xc0] sm:$0xff]
    %v331 = vld [vmem:[#allocation7 + $0xc8] sm:$0xff]
    %v332 = vld [vmem:[#allocation7 + $0xd0] sm:$0xff]
    %v333 = vld [vmem:[#allocation7 + $0xd8] sm:$0xff]
    %v334 = vld [vmem:[#allocation7 + $0xe0] sm:$0xff]
    %v335 = vld [vmem:[#allocation7 + $0xe8] sm:$0xff]
    %v336 = vld [vmem:[#allocation7 + $0xf0] sm:$0xff]
    %v337 = vld [vmem:[#allocation7 + $0xf8] sm:$0xff]
    %v338 = vld [vmem:[#allocation7 + $0x100] sm:$0xff]
    %v339 = vld [vmem:[#allocation7 + $0x108] sm:$0xff]
    %v340 = vld [vmem:[#allocation7 + $0x110] sm:$0xff]
    %v341 = vld [vmem:[#allocation7 + $0x118] sm:$0xff]
    %v342 = vld [vmem:[#allocation7 + $0x120] sm:$0xff]
    %v343 = vld [vmem:[#allocation7 + $0x128] sm:$0xff]
    %v344 = vld [vmem:[#allocation7 + $0x130] sm:$0xff]
    %v345 = vld [vmem:[#allocation7 + $0x138] sm:$0xff]
    %v346 = vld [vmem:[#allocation7 + $0x140] sm:$0xff]
    %v347 = vld [vmem:[#allocation7 + $0x148] sm:$0xff]
    %v348 = vld [vmem:[#allocation7 + $0x150] sm:$0xff]
    %v349 = vld [vmem:[#allocation7 + $0x158] sm:$0xff]
    %v350 = vld [vmem:[#allocation7 + $0x160] sm:$0xff]
    %v351 = vld [vmem:[#allocation7 + $0x168] sm:$0xff]
    %v352 = vld [vmem:[#allocation7 + $0x170] sm:$0xff]
    %v353 = vld [vmem:[#allocation7 + $0x178] sm:$0xff]
    %v354 = vld [vmem:[#allocation7 + $0x180] sm:$0xff]
    %v355 = vld [vmem:[#allocation7 + $0x188] sm:$0xff]
    %v356 = vld [vmem:[#allocation7 + $0x190] sm:$0xff]
    %v357 = vld [vmem:[#allocation7 + $0x198] sm:$0xff]
    %v358 = vld [vmem:[#allocation7 + $0x1a0] sm:$0xff]
    %v359 = vld [vmem:[#allocation7 + $0x1a8] sm:$0xff]
    %v360 = vld [vmem:[#allocation7 + $0x1b0] sm:$0xff]
    %v361 = vld [vmem:[#allocation7 + $0x1b8] sm:$0xff]
    %v362 = vld [vmem:[#allocation7 + $0x1c0] sm:$0xff]
    %v363 = vld [vmem:[#allocation7 + $0x1c8] sm:$0xff]
    %v364 = vld [vmem:[#allocation7 + $0x1d0] sm:$0xff]
    %v365 = vld [vmem:[#allocation7 + $0x1d8] sm:$0xff]
    %v366 = vld [vmem:[#allocation7 + $0x1e0] sm:$0xff]
    %v367 = vld [vmem:[#allocation7 + $0x1e8] sm:$0xff]
    %v368 = vld [vmem:[#allocation7 + $0x1f0] sm:$0xff]
    %v369 = vld [vmem:[#allocation7 + $0x1f8] sm:$0xff]
    %v370 = vld [vmem:[%s7 + $0x6] sm:$0x3]
    %v372 = vlaneseq
    %v373 = vshrl.u32 %v372, 7
    %v374 = vsub.s32 0, %v373
    %v375 = vrot.slane %v370, %v374
    %v376 = vlaneseq
    %v377 = vshrl.u32 %v376, 7
    %v378 = vsub.s32 1, %v377
    %v379 = vrot.slane %v370, %v378
    %382 = vmatprep.subr.mxu0 %v307
    %383 = vmatpush1.msra.mxu0 %v306
    %384 = vmatprep.subr.mxu0 %v309
    %385 = vmatpush1.msra.mxu0 %v308
    %386 = vmatprep.subr.mxu0 %v311
    %387 = vmatpush1.msra.mxu0 %v310
    %388 = vmatprep.subr.mxu0 %v313
    %389 = vmatpush1.msra.mxu0 %v312
    %390 = vmatprep.subr.mxu0 %v315
    %391 = vmatpush1.msra.mxu0 %v314
    %392 = vmatprep.subr.mxu0 %v317
    %393 = vmatpush1.msra.mxu0 %v316
    %394 = vmatprep.subr.mxu0 %v319
    %395 = vmatpush1.msra.mxu0 %v318
    %396 = vmatprep.subr.mxu0 %v321
    %397 = vmatpush1.msra.mxu0 %v320
    %398 = vmatprep.subr.mxu0 %v323
    %399 = vmatpush1.msra.mxu0 %v322
    %400 = vmatprep.subr.mxu0 %v325
    %401 = vmatpush1.msra.mxu0 %v324
    %402 = vmatprep.subr.mxu0 %v327
    %403 = vmatpush1.msra.mxu0 %v326
    %404 = vmatprep.subr.mxu0 %v329
    %405 = vmatpush1.msra.mxu0 %v328
    %406 = vmatprep.subr.mxu0 %v331
    %407 = vmatpush1.msra.mxu0 %v330
    %408 = vmatprep.subr.mxu0 %v333
    %409 = vmatpush1.msra.mxu0 %v332
    %410 = vmatprep.subr.mxu0 %v335
    %411 = vmatpush1.msra.mxu0 %v334
    %412 = vmatprep.subr.mxu0 %v337
    %413 = vmatpush1.msra.mxu0 %v336
    %414 = vmatprep.subr.mxu0 %v339
    %415 = vmatpush1.msra.mxu0 %v338
    %416 = vmatprep.subr.mxu0 %v341
    %417 = vmatpush1.msra.mxu0 %v340
    %418 = vmatprep.subr.mxu0 %v343
    %419 = vmatpush1.msra.mxu0 %v342
    %420 = vmatprep.subr.mxu0 %v345
    %421 = vmatpush1.msra.mxu0 %v344
    %422 = vmatprep.subr.mxu0 %v347
    %423 = vmatpush1.msra.mxu0 %v346
    %424 = vmatprep.subr.mxu0 %v349
    %425 = vmatpush1.msra.mxu0 %v348
    %426 = vmatprep.subr.mxu0 %v351
    %427 = vmatpush1.msra.mxu0 %v350
    %428 = vmatprep.subr.mxu0 %v353
    %429 = vmatpush1.msra.mxu0 %v352
    %430 = vmatprep.subr.mxu0 %v355
    %431 = vmatpush1.msra.mxu0 %v354
    %432 = vmatprep.subr.mxu0 %v357
    %433 = vmatpush1.msra.mxu0 %v356
    %434 = vmatprep.subr.mxu0 %v359
    %435 = vmatpush1.msra.mxu0 %v358
    %436 = vmatprep.subr.mxu0 %v361
    %437 = vmatpush1.msra.mxu0 %v360
    %438 = vmatprep.subr.mxu0 %v363
    %439 = vmatpush1.msra.mxu0 %v362
    %440 = vmatprep.subr.mxu0 %v365
    %441 = vmatpush1.msra.mxu0 %v364
    %442 = vmatprep.subr.mxu0 %v367
    %443 = vmatpush1.msra.mxu0 %v366
    %444 = vmatprep.subr.mxu0 %v369
    %445 = vmatpush1.msra.mxu0 %v368
    %446 = vmatprep.mubr.f32.mxu0 %v305
    %447 = vmatmul.mubr.f32.gmra.mrb[0].mxu0 %v304
    %v448 = vpop.f32.mrb[0].mxu0
    %v449 = vadd.f32 %v375, %v448
    %v450 = vpop.f32.mrb[0].mxu0
    %v451 = vadd.f32 %v379, %v450
    %452 = vdwg.mxu0
    %v453 = vmax.f32 %v449, 0.0
    %v454 = vmax.f32 %v451, 0.0
    %v455 = vld [vmem:[%s7 + $0x8] sm:$0x3]
    %v456 = vld [vmem:[%s7 + $0xa] sm:$0x3]
    %v457 = vrot.slane %v453, 4
    %v458 = vadd.f32 %v453, %v457
    %v459 = vrot.slane %v458, 2
    %v460 = vadd.f32 %v458, %v459
    %v461 = vrot.slane %v460, 1
    %v462 = vadd.f32 %v460, %v461
    %v463 = vrot.slane %v454, 4
    %v464 = vadd.f32 %v454, %v463
    %v465 = vrot.slane %v464, 2
    %v466 = vadd.f32 %v464, %v465
    %v467 = vrot.slane %v466, 1
    %v468 = vadd.f32 %v466, %v467
    %v469 = vmul.f32 %v462, %v253
    %v470 = vmul.f32 %v468, %v253
    %v471 = vsub.f32 %v453, %v469
    %v472 = vsub.f32 %v454, %v470
    %v473 = vmul.f32 %v471, %v471
    %v474 = vmul.f32 %v472, %v472
    %v475 = vrot.slane %v473, 4
    %v476 = vadd.f32 %v473, %v475
    %v477 = vrot.slane %v476, 2
    %v478 = vadd.f32 %v476, %v477
    %v479 = vrot.slane %v478, 1
    %v480 = vadd.f32 %v478, %v479
    %v481 = vrot.slane %v474, 4
    %v482 = vadd.f32 %v474, %v481
    %v483 = vrot.slane %v482, 2
    %v484 = vadd.f32 %v482, %v483
    %v485 = vrot.slane %v484, 1
    %v486 = vadd.f32 %v484, %v485
    %v487 = vmul.f32 %v480, %v253
    %v488 = vmul.f32 %v486, %v253
    %v489 = vadd.f32 %v487, 1e-05
    %v490 = vadd.f32 %v488, 1e-05
    %v491 = vrsqrt.pop %v489
    %v492 = vrsqrt.pop %v490
    %v493 = vmul.f32 %v471, %v491
    %v494 = vmul.f32 %v472, %v492
    %v496 = vlaneseq
    %v497 = vshrl.u32 %v496, 7
    %v498 = vsub.s32 0, %v497
    %v499 = vrot.slane %v455, %v498
    %v500 = vlaneseq
    %v501 = vshrl.u32 %v500, 7
    %v502 = vsub.s32 1, %v501
    %v503 = vrot.slane %v455, %v502
    %v506 = vmul.f32 %v493, %v499
    %v507 = vmul.f32 %v494, %v503
    %v509 = vlaneseq
    %v510 = vshrl.u32 %v509, 7
    %v511 = vsub.s32 0, %v510
    %v512 = vrot.slane %v456, %v511
    %v513 = vlaneseq
    %v514 = vshrl.u32 %v513, 7
    %v515 = vsub.s32 1, %v514
    %v516 = vrot.slane %v456, %v515
    %v519 = vadd.f32 %v506, %v512
    %v520 = vadd.f32 %v507, %v516
    %v521 = vld [vmem:[#allocation8] sm:$0xff]
    %v522 = vld [vmem:[#allocation8 + $0x8] sm:$0xff]
    %v523 = vld [vmem:[#allocation8 + $0x10] sm:$0xff]
    %v524 = vld [vmem:[#allocation8 + $0x18] sm:$0xff]
    %v525 = vld [vmem:[#allocation8 + $0x20] sm:$0xff]
    %v526 = vld [vmem:[#allocation8 + $0x28] sm:$0xff]
    %v527 = vld [vmem:[#allocation8 + $0x30] sm:$0xff]
    %v528 = vld [vmem:[#allocation8 + $0x38] sm:$0xff]
    %v529 = vld [vmem:[#allocation8 + $0x40] sm:$0xff]
    %v530 = vld [vmem:[#allocation8 + $0x48] sm:$0xff]
    %v531 = vld [vmem:[#allocation8 + $0x50] sm:$0xff]
    %v532 = vld [vmem:[#allocation8 + $0x58] sm:$0xff]
    %v533 = vld [vmem:[#allocation8 + $0x60] sm:$0xff]
    %v534 = vld [vmem:[#allocation8 + $0x68] sm:$0xff]
    %v535 = vld [vmem:[#allocation8 + $0x70] sm:$0xff]
    %v536 = vld [vmem:[#allocation8 + $0x78] sm:$0xff]
    %v537 = vld [vmem:[#allocation8 + $0x80] sm:$0xff]
    %v538 = vld [vmem:[#allocation8 + $0x88] sm:$0xff]
    %v539 = vld [vmem:[#allocation8 + $0x90] sm:$0xff]
    %v540 = vld [vmem:[#allocation8 + $0x98] sm:$0xff]
    %v541 = vld [vmem:[#allocation8 + $0xa0] sm:$0xff]
    %v542 = vld [vmem:[#allocation8 + $0xa8] sm:$0xff]
    %v543 = vld [vmem:[#allocation8 + $0xb0] sm:$0xff]
    %v544 = vld [vmem:[#allocation8 + $0xb8] sm:$0xff]
    %v545 = vld [vmem:[#allocation8 + $0xc0] sm:$0xff]
    %v546 = vld [vmem:[#allocation8 + $0xc8] sm:$0xff]
    %v547 = vld [vmem:[#allocation8 + $0xd0] sm:$0xff]
    %v548 = vld [vmem:[#allocation8 + $0xd8] sm:$0xff]
    %v549 = vld [vmem:[#allocation8 + $0xe0] sm:$0xff]
    %v550 = vld [vmem:[#allocation8 + $0xe8] sm:$0xff]
    %v551 = vld [vmem:[#allocation8 + $0xf0] sm:$0xff]
    %v552 = vld [vmem:[#allocation8 + $0xf8] sm:$0xff]
    %v553 = vld [vmem:[%s7 + $0xc] sm:$0x1]
    %v555 = vlaneseq
    %v556 = vshrl.u32 %v555, 7
    %v557 = vsub.s32 0, %v556
    %v558 = vrot.slane %v553, %v557
    %560 = vmatprep.subr.mxu0 0.0
    %561 = vmatpush1.msra.mxu0 %v521
    %562 = vmatprep.subr.mxu0 0.0
    %563 = vmatpush1.msra.mxu0 %v522
    %564 = vmatprep.subr.mxu0 0.0
    %565 = vmatpush1.msra.mxu0 %v523
    %566 = vmatprep.subr.mxu0 0.0
    %567 = vmatpush1.msra.mxu0 %v524
    %568 = vmatprep.subr.mxu0 0.0
    %569 = vmatpush1.msra.mxu0 %v525
    %570 = vmatprep.subr.mxu0 0.0
    %571 = vmatpush1.msra.mxu0 %v526
    %572 = vmatprep.subr.mxu0 0.0
    %573 = vmatpush1.msra.mxu0 %v527
    %574 = vmatprep.subr.mxu0 0.0
    %575 = vmatpush1.msra.mxu0 %v528
    %576 = vmatprep.subr.mxu0 0.0
    %577 = vmatpush1.msra.mxu0 %v529
    %578 = vmatprep.subr.mxu0 0.0
    %579 = vmatpush1.msra.mxu0 %v530
    %580 = vmatprep.subr.mxu0 0.0
    %581 = vmatpush1.msra.mxu0 %v531
    %582 = vmatprep.subr.mxu0 0.0
    %583 = vmatpush1.msra.mxu0 %v532
    %584 = vmatprep.subr.mxu0 0.0
    %585 = vmatpush1.msra.mxu0 %v533
    %586 = vmatprep.subr.mxu0 0.0
    %587 = vmatpush1.msra.mxu0 %v534
    %588 = vmatprep.subr.mxu0 0.0
    %589 = vmatpush1.msra.mxu0 %v535
    %590 = vmatprep.subr.mxu0 0.0
    %591 = vmatpush1.msra.mxu0 %v536
    %592 = vmatprep.subr.mxu0 0.0
    %593 = vmatpush1.msra.mxu0 %v537
    %594 = vmatprep.subr.mxu0 0.0
    %595 = vmatpush1.msra.mxu0 %v538
    %596 = vmatprep.subr.mxu0 0.0
    %597 = vmatpush1.msra.mxu0 %v539
    %598 = vmatprep.subr.mxu0 0.0
    %599 = vmatpush1.msra.mxu0 %v540
    %600 = vmatprep.subr.mxu0 0.0
    %601 = vmatpush1.msra.mxu0 %v541
    %602 = vmatprep.subr.mxu0 0.0
    %603 = vmatpush1.msra.mxu0 %v542
    %604 = vmatprep.subr.mxu0 0.0
    %605 = vmatpush1.msra.mxu0 %v543
    %606 = vmatprep.subr.mxu0 0.0
    %607 = vmatpush1.msra.mxu0 %v544
    %608 = vmatprep.subr.mxu0 0.0
    %609 = vmatpush1.msra.mxu0 %v545
    %610 = vmatprep.subr.mxu0 0.0
    %611 = vmatpush1.msra.mxu0 %v546
    %612 = vmatprep.subr.mxu0 0.0
    %613 = vmatpush1.msra.mxu0 %v547
    %614 = vmatprep.subr.mxu0 0.0
    %615 = vmatpush1.msra.mxu0 %v548
    %616 = vmatprep.subr.mxu0 0.0
    %617 = vmatpush1.msra.mxu0 %v549
    %618 = vmatprep.subr.mxu0 0.0
    %619 = vmatpush1.msra.mxu0 %v550
    %620 = vmatprep.subr.mxu0 0.0
    %621 = vmatpush1.msra.mxu0 %v551
    %622 = vmatprep.subr.mxu0 0.0
    %623 = vmatpush1.msra.mxu0 %v552
    %624 = vmatprep.mubr.f32.mxu0 %v520
    %625 = vmatmul.mubr.f32.gmra.mrb[0].mxu0 %v519
    %v626 = vpop.f32.mrb[0].mxu0
    %v627 = vadd.f32 %v558, %v626
    %v628 = vpop.f32.mrb[0].mxu0
    %629 = vdwg.mxu0
    %vm630 = vcmp.gt.f32.partialorder %v627, 20.0
    %v631 = vmin.f32 %v627, 20.0
    %v632 = vmul.f32 %v631, 1.442695
    %v633 = vpow.pop %v632
    %v634 = vadd.f32 %v633, 1.0
    %v635 = vlog2.pop %v634
    %v636 = vmul.f32 %v635, 0.6931472
    %v637 = vmul.f32 -0.5, %v633
    %v638 = vadd.f32 %v637, 1.0
    %v639 = vmul.f32 %v638, %v633
    %v640 = vand.u32 2147483647, %v633
    %vm641 = vcmp.lt.f32.partialorder %v640, 0.0004427343
    %v642 = vsel %vm641, %v639, %v636
    %v643 = vsel %vm630, %v627, %v642
    %v644 = vlaneseq
    %v645 = vand.u32 %v644, 127
    %vm646 = vcmp.lt.s32.totalorder %v645, 16
    %v647 = vsel %vm646, 1, 0
    %vm648 = vcmp.eq.s32.totalorder %v647, 1
    %v649 = vsel %vm648, %v643, 0.0
    %650 = vadd.xlane.f32.xlu0 %v649
    %v651 = vpop.xlane.xlu0 %650
    %v652 = vrcp.pop %v651
    %v653 = vmul.f32 %v649, %v652
    %v654 = vmul.f32 %v123, %v653
    %v655 = vld [vmem:[#allocation10] sm:$0xff]
    %v656 = vld [vmem:[#allocation10 + $0x8] sm:$0xff]
    %v657 = vld [vmem:[#allocation10 + $0x10] sm:$0xff]
    %v658 = vld [vmem:[#allocation10 + $0x18] sm:$0xff]
    %v659 = vld [vmem:[#allocation10 + $0x20] sm:$0xff]
    %v660 = vld [vmem:[#allocation10 + $0x28] sm:$0xff]
    %v661 = vld [vmem:[#allocation10 + $0x30] sm:$0xff]
    %v662 = vld [vmem:[#allocation10 + $0x38] sm:$0xff]
    %v663 = vld [vmem:[#allocation10 + $0x40] sm:$0xff]
    %v664 = vld [vmem:[#allocation10 + $0x48] sm:$0xff]
    %v665 = vld [vmem:[#allocation10 + $0x50] sm:$0xff]
    %v666 = vld [vmem:[#allocation10 + $0x58] sm:$0xff]
    %v667 = vld [vmem:[#allocation10 + $0x60] sm:$0xff]
    %v668 = vld [vmem:[#allocation10 + $0x68] sm:$0xff]
    %v669 = vld [vmem:[#allocation10 + $0x70] sm:$0xff]
    %v670 = vld [vmem:[#allocation10 + $0x78] sm:$0xff]
    %v671 = vld [vmem:[#allocation10 + $0x80] sm:$0xff]
    %v672 = vld [vmem:[#allocation10 + $0x88] sm:$0xff]
    %v673 = vld [vmem:[#allocation10 + $0x90] sm:$0xff]
    %v674 = vld [vmem:[#allocation10 + $0x98] sm:$0xff]
    %v675 = vld [vmem:[#allocation10 + $0xa0] sm:$0xff]
    %v676 = vld [vmem:[#allocation10 + $0xa8] sm:$0xff]
    %v677 = vld [vmem:[#allocation10 + $0xb0] sm:$0xff]
    %v678 = vld [vmem:[#allocation10 + $0xb8] sm:$0xff]
    %v679 = vld [vmem:[#allocation10 + $0xc0] sm:$0xff]
    %v680 = vld [vmem:[#allocation10 + $0xc8] sm:$0xff]
    %v681 = vld [vmem:[#allocation10 + $0xd0] sm:$0xff]
    %v682 = vld [vmem:[#allocation10 + $0xd8] sm:$0xff]
    %v683 = vld [vmem:[#allocation10 + $0xe0] sm:$0xff]
    %v684 = vld [vmem:[#allocation10 + $0xe8] sm:$0xff]
    %v685 = vld [vmem:[#allocation10 + $0xf0] sm:$0xff]
    %v686 = vld [vmem:[#allocation10 + $0xf8] sm:$0xff]
    %v687 = vld [vmem:[%s7 + $0xd] sm:$0x3]
    %v689 = vlaneseq
    %v690 = vshrl.u32 %v689, 7
    %v691 = vsub.s32 0, %v690
    %v692 = vrot.slane %v687, %v691
    %v693 = vlaneseq
    %v694 = vshrl.u32 %v693, 7
    %v695 = vsub.s32 1, %v694
    %v696 = vrot.slane %v687, %v695
    %699 = vmatprep.subr.mxu0 %v656
    %700 = vmatpush1.msra.mxu0 %v655
    %701 = vmatprep.subr.mxu0 %v658
    %702 = vmatpush1.msra.mxu0 %v657
    %703 = vmatprep.subr.mxu0 %v660
    %704 = vmatpush1.msra.mxu0 %v659
    %705 = vmatprep.subr.mxu0 %v662
    %706 = vmatpush1.msra.mxu0 %v661
    %707 = vmatprep.subr.mxu0 %v664
    %708 = vmatpush1.msra.mxu0 %v663
    %709 = vmatprep.subr.mxu0 %v666
    %710 = vmatpush1.msra.mxu0 %v665
    %711 = vmatprep.subr.mxu0 %v668
    %712 = vmatpush1.msra.mxu0 %v667
    %713 = vmatprep.subr.mxu0 %v670
    %714 = vmatpush1.msra.mxu0 %v669
    %715 = vmatprep.subr.mxu0 %v672
    %716 = vmatpush1.msra.mxu0 %v671
    %717 = vmatprep.subr.mxu0 %v674
    %718 = vmatpush1.msra.mxu0 %v673
    %719 = vmatprep.subr.mxu0 %v676
    %720 = vmatpush1.msra.mxu0 %v675
    %721 = vmatprep.subr.mxu0 %v678
    %722 = vmatpush1.msra.mxu0 %v677
    %723 = vmatprep.subr.mxu0 %v680
    %724 = vmatpush1.msra.mxu0 %v679
    %725 = vmatprep.subr.mxu0 %v682
    %726 = vmatpush1.msra.mxu0 %v681
    %727 = vmatprep.subr.mxu0 %v684
    %728 = vmatpush1.msra.mxu0 %v683
    %729 = vmatprep.subr.mxu0 %v686
    %730 = vmatpush1.msra.mxu0 %v685
    %731 = vmatprep.subr.mxu0 0.0
    %732 = vmatpush1.msra.mxu0 0.0
    %733 = vmatprep.subr.mxu0 0.0
    %734 = vmatpush1.msra.mxu0 0.0
    %735 = vmatprep.subr.mxu0 0.0
    %736 = vmatpush1.msra.mxu0 0.0
    %737 = vmatprep.subr.mxu0 0.0
    %738 = vmatpush1.msra.mxu0 0.0
    %739 = vmatprep.subr.mxu0 0.0
    %740 = vmatpush1.msra.mxu0 0.0
    %741 = vmatprep.subr.mxu0 0.0
    %742 = vmatpush1.msra.mxu0 0.0
    %743 = vmatprep.subr.mxu0 0.0
    %744 = vmatpush1.msra.mxu0 0.0
    %745 = vmatprep.subr.mxu0 0.0
    %746 = vmatpush1.msra.mxu0 0.0
    %747 = vmatprep.subr.mxu0 0.0
    %748 = vmatpush1.msra.mxu0 0.0
    %749 = vmatprep.subr.mxu0 0.0
    %750 = vmatpush1.msra.mxu0 0.0
    %751 = vmatprep.subr.mxu0 0.0
    %752 = vmatpush1.msra.mxu0 0.0
    %753 = vmatprep.subr.mxu0 0.0
    %754 = vmatpush1.msra.mxu0 0.0
    %755 = vmatprep.subr.mxu0 0.0
    %756 = vmatpush1.msra.mxu0 0.0
    %757 = vmatprep.subr.mxu0 0.0
    %758 = vmatpush1.msra.mxu0 0.0
    %759 = vmatprep.subr.mxu0 0.0
    %760 = vmatpush1.msra.mxu0 0.0
    %761 = vmatprep.subr.mxu0 0.0
    %762 = vmatpush1.msra.mxu0 0.0
    %763 = vmatprep.mubr.f32.mxu0 0.0
    %764 = vmatmul.mubr.f32.gmra.mrb[0].mxu0 %v654
    %v765 = vpop.f32.mrb[0].mxu0
    %v766 = vadd.f32 %v692, %v765
    %v767 = vpop.f32.mrb[0].mxu0
    %v768 = vadd.f32 %v696, %v767
    %769 = vdwg.mxu0
    %v770 = vld [vmem:[%s7 + $0xf] sm:$0x3]
    %v771 = vld [vmem:[%s7 + $0x11] sm:$0x3]
    %v772 = vrot.slane %v766, 4
    %v773 = vadd.f32 %v766, %v772
    %v774 = vrot.slane %v773, 2
    %v775 = vadd.f32 %v773, %v774
    %v776 = vrot.slane %v775, 1
    %v777 = vadd.f32 %v775, %v776
    %v778 = vrot.slane %v768, 4
    %v779 = vadd.f32 %v768, %v778
    %v780 = vrot.slane %v779, 2
    %v781 = vadd.f32 %v779, %v780
    %v782 = vrot.slane %v781, 1
    %v783 = vadd.f32 %v781, %v782
    %v784 = vmul.f32 %v777, %v253
    %v785 = vmul.f32 %v783, %v253
    %v786 = vsub.f32 %v766, %v784
    %v787 = vsub.f32 %v768, %v785
    %v788 = vmul.f32 %v786, %v786
    %v789 = vmul.f32 %v787, %v787
    %v790 = vrot.slane %v788, 4
    %v791 = vadd.f32 %v788, %v790
    %v792 = vrot.slane %v791, 2
    %v793 = vadd.f32 %v791, %v792
    %v794 = vrot.slane %v793, 1
    %v795 = vadd.f32 %v793, %v794
    %v796 = vrot.slane %v789, 4
    %v797 = vadd.f32 %v789, %v796
    %v798 = vrot.slane %v797, 2
    %v799 = vadd.f32 %v797, %v798
    %v800 = vrot.slane %v799, 1
    %v801 = vadd.f32 %v799, %v800
    %v802 = vmul.f32 %v795, %v253
    %v803 = vmul.f32 %v801, %v253
    %v804 = vadd.f32 %v802, 1e-05
    %v805 = vadd.f32 %v803, 1e-05
    %v806 = vrsqrt.pop %v804
    %v807 = vrsqrt.pop %v805
    %v808 = vmul.f32 %v786, %v806
    %v809 = vmul.f32 %v787, %v807
    %v811 = vlaneseq
    %v812 = vshrl.u32 %v811, 7
    %v813 = vsub.s32 0, %v812
    %v814 = vrot.slane %v770, %v813
    %v815 = vlaneseq
    %v816 = vshrl.u32 %v815, 7
    %v817 = vsub.s32 1, %v816
    %v818 = vrot.slane %v770, %v817
    %v821 = vmul.f32 %v808, %v814
    %v822 = vmul.f32 %v809, %v818
    %v824 = vlaneseq
    %v825 = vshrl.u32 %v824, 7
    %v826 = vsub.s32 0, %v825
    %v827 = vrot.slane %v771, %v826
    %v828 = vlaneseq
    %v829 = vshrl.u32 %v828, 7
    %v830 = vsub.s32 1, %v829
    %v831 = vrot.slane %v771, %v830
    %v834 = vadd.f32 %v821, %v827
    %v835 = vadd.f32 %v822, %v831
    %v836 = vld [vmem:[#allocation11] sm:$0xff]
    %v837 = vld [vmem:[#allocation11 + $0x8] sm:$0xff]
    %v838 = vld [vmem:[#allocation11 + $0x10] sm:$0xff]
    %v839 = vld [vmem:[#allocation11 + $0x18] sm:$0xff]
    %v840 = vld [vmem:[#allocation11 + $0x20] sm:$0xff]
    %v841 = vld [vmem:[#allocation11 + $0x28] sm:$0xff]
    %v842 = vld [vmem:[#allocation11 + $0x30] sm:$0xff]
    %v843 = vld [vmem:[#allocation11 + $0x38] sm:$0xff]
    %v844 = vld [vmem:[#allocation11 + $0x40] sm:$0xff]
    %v845 = vld [vmem:[#allocation11 + $0x48] sm:$0xff]
    %v846 = vld [vmem:[#allocation11 + $0x50] sm:$0xff]
    %v847 = vld [vmem:[#allocation11 + $0x58] sm:$0xff]
    %v848 = vld [vmem:[#allocation11 + $0x60] sm:$0xff]
    %v849 = vld [vmem:[#allocation11 + $0x68] sm:$0xff]
    %v850 = vld [vmem:[#allocation11 + $0x70] sm:$0xff]
    %v851 = vld [vmem:[#allocation11 + $0x78] sm:$0xff]
    %v852 = vld [vmem:[#allocation11 + $0x80] sm:$0xff]
    %v853 = vld [vmem:[#allocation11 + $0x88] sm:$0xff]
    %v854 = vld [vmem:[#allocation11 + $0x90] sm:$0xff]
    %v855 = vld [vmem:[#allocation11 + $0x98] sm:$0xff]
    %v856 = vld [vmem:[#allocation11 + $0xa0] sm:$0xff]
    %v857 = vld [vmem:[#allocation11 + $0xa8] sm:$0xff]
    %v858 = vld [vmem:[#allocation11 + $0xb0] sm:$0xff]
    %v859 = vld [vmem:[#allocation11 + $0xb8] sm:$0xff]
    %v860 = vld [vmem:[#allocation11 + $0xc0] sm:$0xff]
    %v861 = vld [vmem:[#allocation11 + $0xc8] sm:$0xff]
    %v862 = vld [vmem:[#allocation11 + $0xd0] sm:$0xff]
    %v863 = vld [vmem:[#allocation11 + $0xd8] sm:$0xff]
    %v864 = vld [vmem:[#allocation11 + $0xe0] sm:$0xff]
    %v865 = vld [vmem:[#allocation11 + $0xe8] sm:$0xff]
    %v866 = vld [vmem:[#allocation11 + $0xf0] sm:$0xff]
    %v867 = vld [vmem:[#allocation11 + $0xf8] sm:$0xff]
    %v868 = vld [vmem:[#allocation11 + $0x100] sm:$0xff]
    %v869 = vld [vmem:[#allocation11 + $0x108] sm:$0xff]
    %v870 = vld [vmem:[#allocation11 + $0x110] sm:$0xff]
    %v871 = vld [vmem:[#allocation11 + $0x118] sm:$0xff]
    %v872 = vld [vmem:[#allocation11 + $0x120] sm:$0xff]
    %v873 = vld [vmem:[#allocation11 + $0x128] sm:$0xff]
    %v874 = vld [vmem:[#allocation11 + $0x130] sm:$0xff]
    %v875 = vld [vmem:[#allocation11 + $0x138] sm:$0xff]
    %v876 = vld [vmem:[#allocation11 + $0x140] sm:$0xff]
    %v877 = vld [vmem:[#allocation11 + $0x148] sm:$0xff]
    %v878 = vld [vmem:[#allocation11 + $0x150] sm:$0xff]
    %v879 = vld [vmem:[#allocation11 + $0x158] sm:$0xff]
    %v880 = vld [vmem:[#allocation11 + $0x160] sm:$0xff]
    %v881 = vld [vmem:[#allocation11 + $0x168] sm:$0xff]
    %v882 = vld [vmem:[#allocation11 + $0x170] sm:$0xff]
    %v883 = vld [vmem:[#allocation11 + $0x178] sm:$0xff]
    %v884 = vld [vmem:[#allocation11 + $0x180] sm:$0xff]
    %v885 = vld [vmem:[#allocation11 + $0x188] sm:$0xff]
    %v886 = vld [vmem:[#allocation11 + $0x190] sm:$0xff]
    %v887 = vld [vmem:[#allocation11 + $0x198] sm:$0xff]
    %v888 = vld [vmem:[#allocation11 + $0x1a0] sm:$0xff]
    %v889 = vld [vmem:[#allocation11 + $0x1a8] sm:$0xff]
    %v890 = vld [vmem:[#allocation11 + $0x1b0] sm:$0xff]
    %v891 = vld [vmem:[#allocation11 + $0x1b8] sm:$0xff]
    %v892 = vld [vmem:[#allocation11 + $0x1c0] sm:$0xff]
    %v893 = vld [vmem:[#allocation11 + $0x1c8] sm:$0xff]
    %v894 = vld [vmem:[#allocation11 + $0x1d0] sm:$0xff]
    %v895 = vld [vmem:[#allocation11 + $0x1d8] sm:$0xff]
    %v896 = vld [vmem:[#allocation11 + $0x1e0] sm:$0xff]
    %v897 = vld [vmem:[#allocation11 + $0x1e8] sm:$0xff]
    %v898 = vld [vmem:[#allocation11 + $0x1f0] sm:$0xff]
    %v899 = vld [vmem:[#allocation11 + $0x1f8] sm:$0xff]
    %v900 = vld [vmem:[%s7 + $0x13] sm:$0x3]
    %v902 = vlaneseq
    %v903 = vshrl.u32 %v902, 7
    %v904 = vsub.s32 0, %v903
    %v905 = vrot.slane %v900, %v904
    %v906 = vlaneseq
    %v907 = vshrl.u32 %v906, 7
    %v908 = vsub.s32 1, %v907
    %v909 = vrot.slane %v900, %v908
    %912 = vmatprep.subr.mxu0 %v837
    %913 = vmatpush1.msra.mxu0 %v836
    %914 = vmatprep.subr.mxu0 %v839
    %915 = vmatpush1.msra.mxu0 %v838
    %916 = vmatprep.subr.mxu0 %v841
    %917 = vmatpush1.msra.mxu0 %v840
    %918 = vmatprep.subr.mxu0 %v843
    %919 = vmatpush1.msra.mxu0 %v842
    %920 = vmatprep.subr.mxu0 %v845
    %921 = vmatpush1.msra.mxu0 %v844
    %922 = vmatprep.subr.mxu0 %v847
    %923 = vmatpush1.msra.mxu0 %v846
    %924 = vmatprep.subr.mxu0 %v849
    %925 = vmatpush1.msra.mxu0 %v848
    %926 = vmatprep.subr.mxu0 %v851
    %927 = vmatpush1.msra.mxu0 %v850
    %928 = vmatprep.subr.mxu0 %v853
    %929 = vmatpush1.msra.mxu0 %v852
    %930 = vmatprep.subr.mxu0 %v855
    %931 = vmatpush1.msra.mxu0 %v854
    %932 = vmatprep.subr.mxu0 %v857
    %933 = vmatpush1.msra.mxu0 %v856
    %934 = vmatprep.subr.mxu0 %v859
    %935 = vmatpush1.msra.mxu0 %v858
    %936 = vmatprep.subr.mxu0 %v861
    %937 = vmatpush1.msra.mxu0 %v860
    %938 = vmatprep.subr.mxu0 %v863
    %939 = vmatpush1.msra.mxu0 %v862
    %940 = vmatprep.subr.mxu0 %v865
    %941 = vmatpush1.msra.mxu0 %v864
    %942 = vmatprep.subr.mxu0 %v867
    %943 = vmatpush1.msra.mxu0 %v866
    %944 = vmatprep.subr.mxu0 %v869
    %945 = vmatpush1.msra.mxu0 %v868
    %946 = vmatprep.subr.mxu0 %v871
    %947 = vmatpush1.msra.mxu0 %v870
    %948 = vmatprep.subr.mxu0 %v873
    %949 = vmatpush1.msra.mxu0 %v872
    %950 = vmatprep.subr.mxu0 %v875
    %951 = vmatpush1.msra.mxu0 %v874
    %952 = vmatprep.subr.mxu0 %v877
    %953 = vmatpush1.msra.mxu0 %v876
    %954 = vmatprep.subr.mxu0 %v879
    %955 = vmatpush1.msra.mxu0 %v878
    %956 = vmatprep.subr.mxu0 %v881
    %957 = vmatpush1.msra.mxu0 %v880
    %958 = vmatprep.subr.mxu0 %v883
    %959 = vmatpush1.msra.mxu0 %v882
    %960 = vmatprep.subr.mxu0 %v885
    %961 = vmatpush1.msra.mxu0 %v884
    %962 = vmatprep.subr.mxu0 %v887
    %963 = vmatpush1.msra.mxu0 %v886
    %964 = vmatprep.subr.mxu0 %v889
    %965 = vmatpush1.msra.mxu0 %v888
    %966 = vmatprep.subr.mxu0 %v891
    %967 = vmatpush1.msra.mxu0 %v890
    %968 = vmatprep.subr.mxu0 %v893
    %969 = vmatpush1.msra.mxu0 %v892
    %970 = vmatprep.subr.mxu0 %v895
    %971 = vmatpush1.msra.mxu0 %v894
    %972 = vmatprep.subr.mxu0 %v897
    %973 = vmatpush1.msra.mxu0 %v896
    %974 = vmatprep.subr.mxu0 %v899
    %975 = vmatpush1.msra.mxu0 %v898
    %976 = vmatprep.mubr.f32.mxu0 %v835
    %977 = vmatmul.mubr.f32.gmra.mrb[0].mxu0 %v834
    %v978 = vpop.f32.mrb[0].mxu0
    %v979 = vadd.f32 %v905, %v978
    %v980 = vpop.f32.mrb[0].mxu0
    %v981 = vadd.f32 %v909, %v980
    %982 = vdwg.mxu0
    %v983 = vmax.f32 %v979, 0.0
    %v984 = vmax.f32 %v981, 0.0
    %v985 = vld [vmem:[%s7 + $0x15] sm:$0x3]
    %v986 = vld [vmem:[%s7 + $0x17] sm:$0x3]
    %v987 = vrot.slane %v983, 4
    %v988 = vadd.f32 %v983, %v987
    %v989 = vrot.slane %v988, 2
    %v990 = vadd.f32 %v988, %v989
    %v991 = vrot.slane %v990, 1
    %v992 = vadd.f32 %v990, %v991
    %v993 = vrot.slane %v984, 4
    %v994 = vadd.f32 %v984, %v993
    %v995 = vrot.slane %v994, 2
    %v996 = vadd.f32 %v994, %v995
    %v997 = vrot.slane %v996, 1
    %v998 = vadd.f32 %v996, %v997
    %v999 = vmul.f32 %v992, %v253
    %v1000 = vmul.f32 %v998, %v253
    %v1001 = vsub.f32 %v983, %v999
    %v1002 = vsub.f32 %v984, %v1000
    %v1003 = vmul.f32 %v1001, %v1001
    %v1004 = vmul.f32 %v1002, %v1002
    %v1005 = vrot.slane %v1003, 4
    %v1006 = vadd.f32 %v1003, %v1005
    %v1007 = vrot.slane %v1006, 2
    %v1008 = vadd.f32 %v1006, %v1007
    %v1009 = vrot.slane %v1008, 1
    %v1010 = vadd.f32 %v1008, %v1009
    %v1011 = vrot.slane %v1004, 4
    %v1012 = vadd.f32 %v1004, %v1011
    %v1013 = vrot.slane %v1012, 2
    %v1014 = vadd.f32 %v1012, %v1013
    %v1015 = vrot.slane %v1014, 1
    %v1016 = vadd.f32 %v1014, %v1015
    %v1017 = vmul.f32 %v1010, %v253
    %v1018 = vmul.f32 %v1016, %v253
    %v1019 = vadd.f32 %v1017, 1e-05
    %v1020 = vadd.f32 %v1018, 1e-05
    %v1021 = vrsqrt.pop %v1019
    %v1022 = vrsqrt.pop %v1020
    %v1023 = vmul.f32 %v1001, %v1021
    %v1024 = vmul.f32 %v1002, %v1022
    %v1026 = vlaneseq
    %v1027 = vshrl.u32 %v1026, 7
    %v1028 = vsub.s32 0, %v1027
    %v1029 = vrot.slane %v985, %v1028
    %v1030 = vlaneseq
    %v1031 = vshrl.u32 %v1030, 7
    %v1032 = vsub.s32 1, %v1031
    %v1033 = vrot.slane %v985, %v1032
    %v1036 = vmul.f32 %v1023, %v1029
    %v1037 = vmul.f32 %v1024, %v1033
    %v1039 = vlaneseq
    %v1040 = vshrl.u32 %v1039, 7
    %v1041 = vsub.s32 0, %v1040
    %v1042 = vrot.slane %v986, %v1041
    %v1043 = vlaneseq
    %v1044 = vshrl.u32 %v1043, 7
    %v1045 = vsub.s32 1, %v1044
    %v1046 = vrot.slane %v986, %v1045
    %v1049 = vadd.f32 %v1036, %v1042
    %v1050 = vadd.f32 %v1037, %v1046
    %v1051 = vld [vmem:[#allocation13] sm:$0xff]
    %v1052 = vld [vmem:[#allocation13 + $0x8] sm:$0xff]
    %v1053 = vld [vmem:[#allocation13 + $0x10] sm:$0xff]
    %v1054 = vld [vmem:[#allocation13 + $0x18] sm:$0xff]
    %v1055 = vld [vmem:[#allocation13 + $0x20] sm:$0xff]
    %v1056 = vld [vmem:[#allocation13 + $0x28] sm:$0xff]
    %v1057 = vld [vmem:[#allocation13 + $0x30] sm:$0xff]
    %v1058 = vld [vmem:[#allocation13 + $0x38] sm:$0xff]
    %v1059 = vld [vmem:[#allocation13 + $0x40] sm:$0xff]
    %v1060 = vld [vmem:[#allocation13 + $0x48] sm:$0xff]
    %v1061 = vld [vmem:[#allocation13 + $0x50] sm:$0xff]
    %v1062 = vld [vmem:[#allocation13 + $0x58] sm:$0xff]
    %v1063 = vld [vmem:[#allocation13 + $0x60] sm:$0xff]
    %v1064 = vld [vmem:[#allocation13 + $0x68] sm:$0xff]
    %v1065 = vld [vmem:[#allocation13 + $0x70] sm:$0xff]
    %v1066 = vld [vmem:[#allocation13 + $0x78] sm:$0xff]
    %v1067 = vld [vmem:[#allocation13 + $0x80] sm:$0xff]
    %v1068 = vld [vmem:[#allocation13 + $0x88] sm:$0xff]
    %v1069 = vld [vmem:[#allocation13 + $0x90] sm:$0xff]
    %v1070 = vld [vmem:[#allocation13 + $0x98] sm:$0xff]
    %v1071 = vld [vmem:[#allocation13 + $0xa0] sm:$0xff]
    %v1072 = vld [vmem:[#allocation13 + $0xa8] sm:$0xff]
    %v1073 = vld [vmem:[#allocation13 + $0xb0] sm:$0xff]
    %v1074 = vld [vmem:[#allocation13 + $0xb8] sm:$0xff]
    %v1075 = vld [vmem:[#allocation13 + $0xc0] sm:$0xff]
    %v1076 = vld [vmem:[#allocation13 + $0xc8] sm:$0xff]
    %v1077 = vld [vmem:[#allocation13 + $0xd0] sm:$0xff]
    %v1078 = vld [vmem:[#allocation13 + $0xd8] sm:$0xff]
    %v1079 = vld [vmem:[#allocation13 + $0xe0] sm:$0xff]
    %v1080 = vld [vmem:[#allocation13 + $0xe8] sm:$0xff]
    %v1081 = vld [vmem:[#allocation13 + $0xf0] sm:$0xff]
    %v1082 = vld [vmem:[#allocation13 + $0xf8] sm:$0xff]
    %v1083 = vld [vmem:[%s7 + $0x19] sm:$0x1]
    %v1085 = vlaneseq
    %v1086 = vshrl.u32 %v1085, 7
    %v1087 = vsub.s32 0, %v1086
    %v1088 = vrot.slane %v1083, %v1087
    %1090 = vmatprep.subr.mxu0 0.0
    %1091 = vmatpush1.msra.mxu0 %v1051
    %1092 = vmatprep.subr.mxu0 0.0
    %1093 = vmatpush1.msra.mxu0 %v1052
    %1094 = vmatprep.subr.mxu0 0.0
    %1095 = vmatpush1.msra.mxu0 %v1053
    %1096 = vmatprep.subr.mxu0 0.0
    %1097 = vmatpush1.msra.mxu0 %v1054
    %1098 = vmatprep.subr.mxu0 0.0
    %1099 = vmatpush1.msra.mxu0 %v1055
    %1100 = vmatprep.subr.mxu0 0.0
    %1101 = vmatpush1.msra.mxu0 %v1056
    %1102 = vmatprep.subr.mxu0 0.0
    %1103 = vmatpush1.msra.mxu0 %v1057
    %1104 = vmatprep.subr.mxu0 0.0
    %1105 = vmatpush1.msra.mxu0 %v1058
    %1106 = vmatprep.subr.mxu0 0.0
    %1107 = vmatpush1.msra.mxu0 %v1059
    %1108 = vmatprep.subr.mxu0 0.0
    %1109 = vmatpush1.msra.mxu0 %v1060
    %1110 = vmatprep.subr.mxu0 0.0
    %1111 = vmatpush1.msra.mxu0 %v1061
    %1112 = vmatprep.subr.mxu0 0.0
    %1113 = vmatpush1.msra.mxu0 %v1062
    %1114 = vmatprep.subr.mxu0 0.0
    %1115 = vmatpush1.msra.mxu0 %v1063
    %1116 = vmatprep.subr.mxu0 0.0
    %1117 = vmatpush1.msra.mxu0 %v1064
    %1118 = vmatprep.subr.mxu0 0.0
    %1119 = vmatpush1.msra.mxu0 %v1065
    %1120 = vmatprep.subr.mxu0 0.0
    %1121 = vmatpush1.msra.mxu0 %v1066
    %1122 = vmatprep.subr.mxu0 0.0
    %1123 = vmatpush1.msra.mxu0 %v1067
    %1124 = vmatprep.subr.mxu0 0.0
    %1125 = vmatpush1.msra.mxu0 %v1068
    %1126 = vmatprep.subr.mxu0 0.0
    %1127 = vmatpush1.msra.mxu0 %v1069
    %1128 = vmatprep.subr.mxu0 0.0
    %1129 = vmatpush1.msra.mxu0 %v1070
    %1130 = vmatprep.subr.mxu0 0.0
    %1131 = vmatpush1.msra.mxu0 %v1071
    %1132 = vmatprep.subr.mxu0 0.0
    %1133 = vmatpush1.msra.mxu0 %v1072
    %1134 = vmatprep.subr.mxu0 0.0
    %1135 = vmatpush1.msra.mxu0 %v1073
    %1136 = vmatprep.subr.mxu0 0.0
    %1137 = vmatpush1.msra.mxu0 %v1074
    %1138 = vmatprep.subr.mxu0 0.0
    %1139 = vmatpush1.msra.mxu0 %v1075
    %1140 = vmatprep.subr.mxu0 0.0
    %1141 = vmatpush1.msra.mxu0 %v1076
    %1142 = vmatprep.subr.mxu0 0.0
    %1143 = vmatpush1.msra.mxu0 %v1077
    %1144 = vmatprep.subr.mxu0 0.0
    %1145 = vmatpush1.msra.mxu0 %v1078
    %1146 = vmatprep.subr.mxu0 0.0
    %1147 = vmatpush1.msra.mxu0 %v1079
    %1148 = vmatprep.subr.mxu0 0.0
    %1149 = vmatpush1.msra.mxu0 %v1080
    %1150 = vmatprep.subr.mxu0 0.0
    %1151 = vmatpush1.msra.mxu0 %v1081
    %1152 = vmatprep.subr.mxu0 0.0
    %1153 = vmatpush1.msra.mxu0 %v1082
    %1154 = vmatprep.mubr.f32.mxu0 %v1050
    %1155 = vmatmul.mubr.f32.gmra.mrb[0].mxu0 %v1049
    %v1156 = vpop.f32.mrb[0].mxu0
    %v1157 = vadd.f32 %v1088, %v1156
    %v1158 = vpop.f32.mrb[0].mxu0
    %1159 = vdwg.mxu0
    %1160 = vst [vmem:[#allocation14] sm:$0xff] %v1157
    %1161 = vst [vmem:[#allocation14 + $0x8] sm:$0xff] %v649
    %1162 = vst [vmem:[#allocation14 + $0x10] sm:$0xff] %v653
    %1163 = vst [vmem:[#allocation14 + $0x18] sm:$0xff] %v627
    // Predicated region
    $region62: #{tpu_custom_call.1} parent=1 // pred_check
      _
    $region63: #{tpu_custom_call.1} parent=1 // pred_check_branch
      %1165 = sbr.rel (0) target = $region65
    $region64: #{tpu_custom_call.1} parent=1 // pred_region
      %s1167 = ssub.s32 512, 512
      %1168 = vsyncadd [#allocation4], %s1167
      %s1170 = sshll.u32 [#allocation14], 4
      %s1171 = int_to_ptr.vmem [resolvable:$true] %s1170
      %1173 = dma.vmem_to_hbm [thread:$0]  %s1171, 512, %s8, [#allocation4]
    $region65: #{tpu_custom_call.1} parent=1 // pred_fallthru
      _
    // Predicated region
    $region66: #{tpu_custom_call.1} parent=1 // pred_check
      _
    $region67: #{tpu_custom_call.1} parent=1 // pred_check_branch
      %1175 = sbr.rel (0) target = $region69
    $region68: #{tpu_custom_call.1} parent=1 // pred_region
      %1176 = dma.done [#allocation4], 512
    $region69: #{tpu_custom_call.1} parent=1 // pred_fallthru
      _
    %1177 = vsyncpa [#allocation3], 1
    %1178 = vsyncpa [#allocation6], 1
    %1179 = vsyncpa [#allocation9], 1
    %1180 = vsyncpa [#allocation12], 1
    %1181 = vsyncpa [#allocation4], 1

</llo_original>
